<compile_context>
chip_gen: v7x
topology: tpu7x:2x2x1
jax: 0.10.0
libtpu: 0.0.40
codegen_flags: <defaults>
</compile_context>

<pallas_src>
import math
from math import ceil
import functools

import jax
import jax.numpy as jnp
from jax.experimental import pallas as pl
from jax.experimental.pallas import tpu as pltpu


# ----------------------------------------------------------------------------- helpers

def _round_up(a, b):
    return ((a + b - 1) // b) * b


def _ln(y, gamma, beta, eps=1e-5):
    # f32 LayerNorm; rsqrt goes to the EUP slot.
    mu = jnp.mean(y, axis=-1, keepdims=True)
    d = y - mu
    var = jnp.mean(d * d, axis=-1, keepdims=True)
    return d * jax.lax.rsqrt(var + eps) * gamma + beta


_VMEM_LIMIT = 32 * 1024 * 1024  # within scoped defaults on v5e/v6e/v7x


# ----------------------------------------------------------------------------- kernels

def encoder_fused_kernel(x_ref, pe_w_ref, pe_b_ref, pe_g_ref, pe_bt_ref,
                         pm_g1_ref, pm_b1_ref, pm_w_ref, pm_g2_ref, pm_b2_ref,
                         o_ref):
    # x_ref: (4, tm, Kpe) bf16 -- the four 4x4 patches of one 2x2 merge group,
    #        in Swin concat order (x0, x1, x2, x3).
    # Fused: patch-embed (matmul + bias + LN(F)) per patch,
    #        LN(4F) via partial-sum stats (no lane-misaligned concat),
    #        Linear(4F,2F,no bias) as 4 accumulated partial matmuls, LN(2F).
    f = pe_g_ref.shape[-1]

    ys = []
    ssum = None
    ssq = None
    for i in range(4):
        yi = jnp.dot(x_ref[i], pe_w_ref[...],
                     preferred_element_type=jnp.float32) + pe_b_ref[...]
        yi = _ln(yi, pe_g_ref[...], pe_bt_ref[...])                 # (tm, F) f32
        ys.append(yi)
        si = jnp.sum(yi, axis=-1, keepdims=True)
        qi = jnp.sum(yi * yi, axis=-1, keepdims=True)
        ssum = si if ssum is None else ssum + si
        ssq = qi if ssq is None else ssq + qi

    # LayerNorm over the (virtual) concatenated 4F axis.
    mu = ssum / (4.0 * f)
    var = jnp.maximum(ssq / (4.0 * f) - mu * mu, 0.0)
    inv = jax.lax.rsqrt(var + 1e-5)

    # Linear(4F, 2F) = sum_i cat_i @ W[i*F:(i+1)*F, :]
    z = None
    for i in range(4):
        ci = (ys[i] - mu) * inv * pm_g1_ref[i] + pm_b1_ref[i]       # (tm, F) f32
        zi = jnp.dot(ci.astype(pm_w_ref.dtype), pm_w_ref[i],
                     preferred_element_type=jnp.float32)            # (tm, 2F)
        z = zi if z is None else z + zi

    o_ref[...] = _ln(z, pm_g2_ref[...], pm_b2_ref[...]).astype(o_ref.dtype)


def linear_head_kernel(x_ref, w_ref, b_ref, o_ref, acc_ref):
    # tiled (M, N, K) matmul + bias; K is the innermost ("arbitrary") grid axis.
    k = pl.program_id(2)
    nk = pl.num_programs(2)

    @pl.when(k == 0)
    def _():
        acc_ref[...] = jnp.zeros_like(acc_ref)

    acc_ref[...] += jnp.dot(x_ref[...], w_ref[...],
                            preferred_element_type=jnp.float32)

    @pl.when(k == nk - 1)
    def _():
        o_ref[...] = acc_ref[...] + b_ref[...]


def arcface_head_kernel(x_ref, w_ref, xinv_ref, label_ref, o_ref, acc_ref,
                        *, s, cos_m, sin_m, th, mm, tn):
    # w columns are pre-normalized at init and 1/||x|| is a precomputed side
    # input, so the K loop is a pure MXU accumulation.
    # program_id / num_programs hoisted to top level (required for interpret
    # mode: the cond-branch jaxpr must not contain the program_id primitive).
    j = pl.program_id(1)
    k = pl.program_id(2)
    nk = pl.num_programs(2)

    @pl.when(k == 0)
    def _():
        acc_ref[...] = jnp.zeros_like(acc_ref)

    acc_ref[...] += jnp.dot(x_ref[...], w_ref[...],
                            preferred_element_type=jnp.float32)

    @pl.when(k == nk - 1)
    def _():
        cosine = acc_ref[...] * xinv_ref[...]
        sine = jnp.sqrt(jnp.clip(1.0 - cosine * cosine, 0.0, 1.0))
        phi = cosine * cos_m - sine * sin_m
        phi = jnp.where(cosine > th, phi, cosine - mm)
        col = jax.lax.broadcasted_iota(jnp.int32, cosine.shape, 1) + j * tn
        onehot = col == label_ref[...]           # (tm, tn) via (tm,1) broadcast
        o_ref[...] = jnp.where(onehot, phi, cosine) * s


# ----------------------------------------------------------------------------- model

class FRModelPallas:
    def __init__(self, in_channel, n_class, img_size, n_feats=96, depth=2,
                 use_arc_face=False, key=jax.random.PRNGKey(0)):
        assert depth == 2, "stand-in encoder built for depth=2"
        self.in_channel = in_channel
        self.n_class = n_class
        self.img_size = img_size
        self.n_feats = n_feats
        self.depth = depth
        self.use_arc_face = use_arc_face

        sp = ceil(img_size / 4 / 2 ** (depth - 1))       # output spatial size
        self.out_sp = sp
        self.flatten_size = sp * sp * n_feats * 2 ** (depth - 1)

        C, F, F2 = in_channel, n_feats, 2 * n_feats
        Kpe = C * 16
        flat = self.flatten_size
        hw = sp * sp

        # head tiling: lane-dense class dim padded to a 256 multiple (tn=256
        # feeds the 256x256 MXU on v6e/v7x; harmless 2-pass on v5e's 128x128).
        self.N_pad = _round_up(n_class, 256)
        self.tn = 256
        k128 = _round_up(flat, 128)
        if k128 % 512 == 0:
            self.tk = 512
        elif k128 % 256 == 0:
            self.tk = 256
        else:
            self.tk = 128
        self.K_pad = k128

        keys = iter(jax.random.split(key, 8))

        def xavier(kk, shape):
            lim = math.sqrt(6.0 / (shape[0] + shape[1]))
            return jax.random.uniform(kk, shape, jnp.float32, -lim, lim)

        def pad2(w, rows, cols):
            return jnp.pad(w, ((0, rows - w.shape[0]), (0, cols - w.shape[1])))

        # Permutation absorbing the reference's channel-major (NCHW) feature
        # flatten into the head weights: token-major row t <- channel-major row.
        t = jnp.arange(flat)
        perm = (t % F2) * hw + (t // F2)

        # linear_prob weight, stored (E, N), rows reordered to token-major order
        lp_w = xavier(next(keys), (flat, n_class))[perm, :]

        # ArcFace weight: PyTorch layout (class, embed); pre-normalize each class
        # vector (F.normalize(weight)) once at init, transpose to (E, N), permute.
        af_w = xavier(next(keys), (n_class, flat))
        af_w = af_w / jnp.maximum(
            jnp.sqrt(jnp.sum(af_w * af_w, axis=1, keepdims=True)), 1e-12)
        af_w = af_w.T[perm, :]

        self.p = {
            # patch embed: Conv2d(C, F, k=4, s=4) as matmul + patch_norm LayerNorm
            "pe_w": xavier(next(keys), (Kpe, F)).astype(jnp.bfloat16),
            "pe_b": jnp.zeros((1, F), jnp.float32),
            "pe_g": jnp.ones((1, F), jnp.float32),
            "pe_beta": jnp.zeros((1, F), jnp.float32),
            # patch merging: LN(4F) -> Linear(4F, 2F, bias=False) -> out-norm LN(2F)
            # (4F params stored pre-split into 4 blocks of F to keep lanes aligned)
            "pm_g1": jnp.ones((4, 1, F), jnp.float32),
            "pm_b1": jnp.zeros((4, 1, F), jnp.float32),
            "pm_w": xavier(next(keys), (4 * F, F2)).reshape(4, F, F2).astype(jnp.bfloat16),
            "pm_g2": jnp.ones((1, F2), jnp.float32),
            "pm_b2": jnp.zeros((1, F2), jnp.float32),
            # heads (zero-padded to lane-dense K_pad x N_pad, bf16 for the MXU)
            "lp_w": pad2(lp_w, self.K_pad, self.N_pad).astype(jnp.bfloat16),
            "lp_b": jnp.zeros((1, self.N_pad), jnp.float32),
            "af_w": pad2(af_w, self.K_pad, self.N_pad).astype(jnp.bfloat16),
        }

        m, s = 0.5, 30.0
        self._af = dict(s=s, cos_m=math.cos(m), sin_m=math.sin(m),
                        th=math.cos(math.pi - m), mm=math.sin(math.pi - m) * m)

    # ---- fused encoder stage (shape-faithful Swin stand-in) ----
    def _encode(self, x):
        B, C, H, W = x.shape
        assert H % 8 == 0 and W % 8 == 0 and H // 8 == self.out_sp
        Hm, Wm = H // 8, W // 8
        F, F2 = self.n_feats, 2 * self.n_feats
        Kpe = C * 16
        M = B * Hm * Wm

        # Group the 4x4 patches into 2x2 merge groups (Swin concat order x0..x3):
        #   (B,C,H,W) -> (4, M, C*16), per-patch flatten order (C, kh, kw).
        # bf16 cast is fused into the same XLA copy.
        # TODO(synk): fold this strided gather into the kernel's HBM->VMEM DMA
        # via Element-indexed BlockSpecs on a reshaped view of x.
        p = x.reshape(B, C, Hm, 2, 4, Wm, 2, 4)
        p = p.transpose(6, 3, 0, 2, 5, 1, 4, 7)       # (wsub,hsub,B,hm,wm,C,kh,kw)
        x4 = p.reshape(4, M, Kpe).astype(jnp.bfloat16)

        tm = min(1024, _round_up(M, 8))
        M_pad = _round_up(M, tm)
        if M_pad != M:
            x4 = jnp.pad(x4, ((0, 0), (0, M_pad - M), (0, 0)))

        out = pl.pallas_call(
            encoder_fused_kernel,
            out_shape=jax.ShapeDtypeStruct((M_pad, F2), jnp.bfloat16),
            grid_spec=pltpu.PrefetchScalarGridSpec(
                num_scalar_prefetch=0,
                grid=(M_pad // tm,),
                in_specs=[
                    pl.BlockSpec((4, tm, Kpe), lambda i: (0, i, 0)),
                    pl.BlockSpec((Kpe, F), lambda i: (0, 0)),      # weights resident
                    pl.BlockSpec((1, F), lambda i: (0, 0)),
                    pl.BlockSpec((1, F), lambda i: (0, 0)),
                    pl.BlockSpec((1, F), lambda i: (0, 0)),
                    pl.BlockSpec((4, 1, F), lambda i: (0, 0, 0)),
                    pl.BlockSpec((4, 1, F), lambda i: (0, 0, 0)),
                    pl.BlockSpec((4, F, F2), lambda i: (0, 0, 0)),
                    pl.BlockSpec((1, F2), lambda i: (0, 0)),
                    pl.BlockSpec((1, F2), lambda i: (0, 0)),
                ],
                out_specs=pl.BlockSpec((tm, F2), lambda i: (i, 0)),
            ),
            compiler_params=pltpu.CompilerParams(
                dimension_semantics=("parallel",),
                vmem_limit_bytes=_VMEM_LIMIT),
        )(x4, self.p["pe_w"], self.p["pe_b"], self.p["pe_g"], self.p["pe_beta"],
          self.p["pm_g1"], self.p["pm_b1"], self.p["pm_w"],
          self.p["pm_g2"], self.p["pm_b2"])

        if M_pad != M:
            out = out[:M]
        # token-major flatten (bf16); the reference's channel-major flatten is
        # absorbed into the head weights via the row permutation done at init.
        return out.reshape(B, -1)                      # (B, flatten_size) bf16

    # ---- tiled head ----
    def _head(self, feat, label=None):
        B = feat.shape[0]
        flat = self.flatten_size
        # one M tile covering the (padded) batch -> head weight streamed once.
        tm = min(512, _round_up(B, 8))
        M_pad = _round_up(B, tm)

        x = feat
        if self.K_pad != flat or M_pad != B:
            x = jnp.pad(x, ((0, M_pad - B), (0, self.K_pad - flat)))

        grid = (M_pad // tm, self.N_pad // self.tn, self.K_pad // self.tk)
        cparams = pltpu.CompilerParams(
            dimension_semantics=("parallel", "parallel", "arbitrary"),
            vmem_limit_bytes=_VMEM_LIMIT)
        # TODO(synk): on v7x a (1,1,K) grid leaves the second TensorCore idle;
        # for large heads split M or K across cores with a cheap combine.

        if self.use_arc_face:
            # per-row 1/||x|| computed once (not per N/K tile inside the kernel);
            # eps matches F.normalize(eps=1e-12) squared.
            x_inv = jax.lax.rsqrt(jnp.maximum(
                jnp.sum(jnp.square(x.astype(jnp.float32)), axis=-1, keepdims=True),
                1e-24))
            lab = jnp.zeros((M_pad, 1), jnp.int32).at[:B, 0].set(
                label.astype(jnp.int32))
            kernel = functools.partial(arcface_head_kernel, tn=self.tn, **self._af)
            out = pl.pallas_call(
                kernel,
                out_shape=jax.ShapeDtypeStruct((M_pad, self.N_pad), jnp.float32),
                grid_spec=pltpu.PrefetchScalarGridSpec(
                    num_scalar_prefetch=0,
                    grid=grid,
                    in_specs=[
                        pl.BlockSpec((tm, self.tk), lambda i, j, k: (i, k)),
                        pl.BlockSpec((self.tk, self.tn), lambda i, j, k: (k, j)),
                        pl.BlockSpec((tm, 1), lambda i, j, k: (i, 0)),
                        pl.BlockSpec((tm, 1), lambda i, j, k: (i, 0)),
                    ],
                    out_specs=pl.BlockSpec((tm, self.tn), lambda i, j, k: (i, j)),
                    scratch_shapes=[
                        pltpu.VMEM((tm, self.tn), jnp.float32),   # x@w accumulator
                    ]),
                compiler_params=cparams,
            )(x, self.p["af_w"], x_inv, lab)
        else:
            out = pl.pallas_call(
                linear_head_kernel,
                out_shape=jax.ShapeDtypeStruct((M_pad, self.N_pad), jnp.float32),
                grid_spec=pltpu.PrefetchScalarGridSpec(
                    num_scalar_prefetch=0,
                    grid=grid,
                    in_specs=[
                        pl.BlockSpec((tm, self.tk), lambda i, j, k: (i, k)),
                        pl.BlockSpec((self.tk, self.tn), lambda i, j, k: (k, j)),
                        pl.BlockSpec((1, self.tn), lambda i, j, k: (0, j)),
                    ],
                    out_specs=pl.BlockSpec((tm, self.tn), lambda i, j, k: (i, j)),
                    scratch_shapes=[pltpu.VMEM((tm, self.tn), jnp.float32)]),
                compiler_params=cparams,
            )(x, self.p["lp_w"], self.p["lp_b"])

        return out[:B, :self.n_class]

    def __call__(self, x, label=None):
        feat = self._encode(x)
        if self.use_arc_face:
            if label is None:
                raise ValueError("ArcFace head requires a label")
            output = self._head(feat, label)
        else:
            output = self._head(feat)
        return feat, output


# ----------------------------------------------------------------------------- main

if __name__ == "__main__":
    key = jax.random.PRNGKey(0)
    kx, kl, kp = jax.random.split(key, 3)

    B, C, IMG, N_CLASS = 2, 4, 16, 10
    x = jax.random.normal(kx, (B, C, IMG, IMG), jnp.float32)      # NCHW
    label = jax.random.randint(kl, (B,), 0, N_CLASS, jnp.int32)

    # default path: use_arc_face=False -> linear_prob head
    model = FRModelPallas(in_channel=C, n_class=N_CLASS, img_size=IMG,
                          n_feats=96, depth=2, use_arc_face=False, key=kp)
    feat, logits = model(x)
    jax.block_until_ready((feat, logits))
    assert feat.shape == (B, model.flatten_size)
    assert logits.shape == (B, N_CLASS)
    assert bool(jnp.all(jnp.isfinite(feat.astype(jnp.float32))))
    assert bool(jnp.all(jnp.isfinite(logits)))

    # also exercise the ArcFace kernel (reference forward omits the label arg,
    # so it is run here explicitly with a label)
    model_af = FRModelPallas(in_channel=C, n_class=N_CLASS, img_size=IMG,
                             n_feats=96, depth=2, use_arc_face=True, key=kp)
    feat2, arc_out = model_af(x, label)
    jax.block_until_ready((feat2, arc_out))
    assert arc_out.shape == (B, N_CLASS)
    assert bool(jnp.all(jnp.isfinite(arc_out)))

    print("KERNEL_OK")
</pallas_src>

<mosaic_0001>
module attributes {stable_mosaic.version = 11 : i64} {
  func.func @encoder_fused_kernel(%arg0: i32, %arg1: memref<4x8x64xbf16, #tpu.memory_space<vmem>>, %arg2: memref<64x96xbf16, #tpu.memory_space<vmem>>, %arg3: memref<1x96xf32, #tpu.memory_space<vmem>>, %arg4: memref<1x96xf32, #tpu.memory_space<vmem>>, %arg5: memref<1x96xf32, #tpu.memory_space<vmem>>, %arg6: memref<4x1x96xf32, #tpu.memory_space<vmem>>, %arg7: memref<4x1x96xf32, #tpu.memory_space<vmem>>, %arg8: memref<4x96x192xbf16, #tpu.memory_space<vmem>>, %arg9: memref<1x192xf32, #tpu.memory_space<vmem>>, %arg10: memref<1x192xf32, #tpu.memory_space<vmem>>, %arg11: memref<8x192xbf16, #tpu.memory_space<vmem>>) attributes {dimension_semantics = [#tpu.dimension_semantics<parallel>], iteration_bounds = array<i64: 1>, scalar_prefetch = 0 : i64, scratch_operands = 0 : i64, tpu.core_type = #tpu.core_type<tc>, window_params = [{transform_indices = @transform_0, window_bounds = array<i64: 4, 8, 64>}, {pipeline_mode = #tpu.pipeline_mode<synchronous>, transform_indices = @transform_1, window_bounds = array<i64: 64, 96>}, {pipeline_mode = #tpu.pipeline_mode<synchronous>, transform_indices = @transform_2, window_bounds = array<i64: 1, 96>}, {pipeline_mode = #tpu.pipeline_mode<synchronous>, transform_indices = @transform_3, window_bounds = array<i64: 1, 96>}, {pipeline_mode = #tpu.pipeline_mode<synchronous>, transform_indices = @transform_4, window_bounds = array<i64: 1, 96>}, {pipeline_mode = #tpu.pipeline_mode<synchronous>, transform_indices = @transform_5, window_bounds = array<i64: 4, 1, 96>}, {pipeline_mode = #tpu.pipeline_mode<synchronous>, transform_indices = @transform_6, window_bounds = array<i64: 4, 1, 96>}, {pipeline_mode = #tpu.pipeline_mode<synchronous>, transform_indices = @transform_7, window_bounds = array<i64: 4, 96, 192>}, {pipeline_mode = #tpu.pipeline_mode<synchronous>, transform_indices = @transform_8, window_bounds = array<i64: 1, 192>}, {pipeline_mode = #tpu.pipeline_mode<synchronous>, transform_indices = @transform_9, window_bounds = array<i64: 1, 192>}, {transform_indices = @transform_10, window_bounds = array<i64: 8, 192>}]} {
    %c0 = arith.constant 0 : index
    %c0_0 = arith.constant 0 : index
    %c0_1 = arith.constant 0 : index
    %0 = vector.load %arg1[%c0, %c0_0, %c0_1] : memref<4x8x64xbf16, #tpu.memory_space<vmem>>, vector<1x8x64xbf16>
    %1 = vector.shape_cast %0 : vector<1x8x64xbf16> to vector<8x64xbf16>
    %c0_2 = arith.constant 0 : index
    %c0_3 = arith.constant 0 : index
    %2 = vector.load %arg2[%c0_2, %c0_3] : memref<64x96xbf16, #tpu.memory_space<vmem>>, vector<64x96xbf16>
    %cst = arith.constant dense<0.000000e+00> : vector<8x96xf32>
    %3 = tpu.matmul %1, %2, %cst {dimension_numbers = #tpu.dot_dimension_numbers<[1], [0], [0], [1], [0, 0, 1, 1], [], []>} : vector<8x64xbf16>, vector<64x96xbf16>, vector<8x96xf32> -> vector<8x96xf32>
    %c0_4 = arith.constant 0 : index
    %c0_5 = arith.constant 0 : index
    %4 = vector.load %arg3[%c0_4, %c0_5] : memref<1x96xf32, #tpu.memory_space<vmem>>, vector<1x96xf32>
    %5 = vector.broadcast %4 : vector<1x96xf32> to vector<8x96xf32>
    %6 = arith.addf %3, %5 : vector<8x96xf32>
    %c0_6 = arith.constant 0 : index
    %c0_7 = arith.constant 0 : index
    %7 = vector.load %arg4[%c0_6, %c0_7] : memref<1x96xf32, #tpu.memory_space<vmem>>, vector<1x96xf32>
    %c0_8 = arith.constant 0 : index
    %c0_9 = arith.constant 0 : index
    %8 = vector.load %arg5[%c0_8, %c0_9] : memref<1x96xf32, #tpu.memory_space<vmem>>, vector<1x96xf32>
    %cst_10 = arith.constant dense<0.000000e+00> : vector<8xf32>
    %9 = vector.multi_reduction <add>, %6, %cst_10 [1] : vector<8x96xf32> to vector<8xf32>
    %10 = vector.shape_cast %9 : vector<8xf32> to vector<8x1xf32>
    %cst_11 = arith.constant 9.600000e+01 : f32
    %11 = vector.broadcast %cst_11 : f32 to vector<8x1xf32>
    %12 = arith.divf %10, %11 : vector<8x1xf32>
    %13 = vector.broadcast %12 : vector<8x1xf32> to vector<8x96xf32>
    %14 = arith.subf %6, %13 : vector<8x96xf32>
    %15 = arith.mulf %14, %14 : vector<8x96xf32>
    %cst_12 = arith.constant dense<0.000000e+00> : vector<8xf32>
    %16 = vector.multi_reduction <add>, %15, %cst_12 [1] : vector<8x96xf32> to vector<8xf32>
    %17 = vector.shape_cast %16 : vector<8xf32> to vector<8x1xf32>
    %cst_13 = arith.constant 9.600000e+01 : f32
    %18 = vector.broadcast %cst_13 : f32 to vector<8x1xf32>
    %19 = arith.divf %17, %18 : vector<8x1xf32>
    %cst_14 = arith.constant 9.99999974E-6 : f32
    %20 = vector.broadcast %cst_14 : f32 to vector<8x1xf32>
    %21 = arith.addf %19, %20 : vector<8x1xf32>
    %22 = math.rsqrt %21 : vector<8x1xf32>
    %23 = vector.broadcast %22 : vector<8x1xf32> to vector<8x96xf32>
    %24 = arith.mulf %14, %23 : vector<8x96xf32>
    %25 = vector.broadcast %7 : vector<1x96xf32> to vector<8x96xf32>
    %26 = arith.mulf %24, %25 : vector<8x96xf32>
    %27 = vector.broadcast %8 : vector<1x96xf32> to vector<8x96xf32>
    %28 = arith.addf %26, %27 : vector<8x96xf32>
    %cst_15 = arith.constant dense<0.000000e+00> : vector<8xf32>
    %29 = vector.multi_reduction <add>, %28, %cst_15 [1] : vector<8x96xf32> to vector<8xf32>
    %30 = vector.shape_cast %29 : vector<8xf32> to vector<8x1xf32>
    %31 = arith.mulf %28, %28 : vector<8x96xf32>
    %cst_16 = arith.constant dense<0.000000e+00> : vector<8xf32>
    %32 = vector.multi_reduction <add>, %31, %cst_16 [1] : vector<8x96xf32> to vector<8xf32>
    %33 = vector.shape_cast %32 : vector<8xf32> to vector<8x1xf32>
    %c1 = arith.constant 1 : index
    %c0_17 = arith.constant 0 : index
    %c0_18 = arith.constant 0 : index
    %34 = vector.load %arg1[%c1, %c0_17, %c0_18] : memref<4x8x64xbf16, #tpu.memory_space<vmem>>, vector<1x8x64xbf16>
    %35 = vector.shape_cast %34 : vector<1x8x64xbf16> to vector<8x64xbf16>
    %c0_19 = arith.constant 0 : index
    %c0_20 = arith.constant 0 : index
    %36 = vector.load %arg2[%c0_19, %c0_20] : memref<64x96xbf16, #tpu.memory_space<vmem>>, vector<64x96xbf16>
    %cst_21 = arith.constant dense<0.000000e+00> : vector<8x96xf32>
    %37 = tpu.matmul %35, %36, %cst_21 {dimension_numbers = #tpu.dot_dimension_numbers<[1], [0], [0], [1], [0, 0, 1, 1], [], []>} : vector<8x64xbf16>, vector<64x96xbf16>, vector<8x96xf32> -> vector<8x96xf32>
    %c0_22 = arith.constant 0 : index
    %c0_23 = arith.constant 0 : index
    %38 = vector.load %arg3[%c0_22, %c0_23] : memref<1x96xf32, #tpu.memory_space<vmem>>, vector<1x96xf32>
    %39 = vector.broadcast %38 : vector<1x96xf32> to vector<8x96xf32>
    %40 = arith.addf %37, %39 : vector<8x96xf32>
    %c0_24 = arith.constant 0 : index
    %c0_25 = arith.constant 0 : index
    %41 = vector.load %arg4[%c0_24, %c0_25] : memref<1x96xf32, #tpu.memory_space<vmem>>, vector<1x96xf32>
    %c0_26 = arith.constant 0 : index
    %c0_27 = arith.constant 0 : index
    %42 = vector.load %arg5[%c0_26, %c0_27] : memref<1x96xf32, #tpu.memory_space<vmem>>, vector<1x96xf32>
    %cst_28 = arith.constant dense<0.000000e+00> : vector<8xf32>
    %43 = vector.multi_reduction <add>, %40, %cst_28 [1] : vector<8x96xf32> to vector<8xf32>
    %44 = vector.shape_cast %43 : vector<8xf32> to vector<8x1xf32>
    %cst_29 = arith.constant 9.600000e+01 : f32
    %45 = vector.broadcast %cst_29 : f32 to vector<8x1xf32>
    %46 = arith.divf %44, %45 : vector<8x1xf32>
    %47 = vector.broadcast %46 : vector<8x1xf32> to vector<8x96xf32>
    %48 = arith.subf %40, %47 : vector<8x96xf32>
    %49 = arith.mulf %48, %48 : vector<8x96xf32>
    %cst_30 = arith.constant dense<0.000000e+00> : vector<8xf32>
    %50 = vector.multi_reduction <add>, %49, %cst_30 [1] : vector<8x96xf32> to vector<8xf32>
    %51 = vector.shape_cast %50 : vector<8xf32> to vector<8x1xf32>
    %cst_31 = arith.constant 9.600000e+01 : f32
    %52 = vector.broadcast %cst_31 : f32 to vector<8x1xf32>
    %53 = arith.divf %51, %52 : vector<8x1xf32>
    %cst_32 = arith.constant 9.99999974E-6 : f32
    %54 = vector.broadcast %cst_32 : f32 to vector<8x1xf32>
    %55 = arith.addf %53, %54 : vector<8x1xf32>
    %56 = math.rsqrt %55 : vector<8x1xf32>
    %57 = vector.broadcast %56 : vector<8x1xf32> to vector<8x96xf32>
    %58 = arith.mulf %48, %57 : vector<8x96xf32>
    %59 = vector.broadcast %41 : vector<1x96xf32> to vector<8x96xf32>
    %60 = arith.mulf %58, %59 : vector<8x96xf32>
    %61 = vector.broadcast %42 : vector<1x96xf32> to vector<8x96xf32>
    %62 = arith.addf %60, %61 : vector<8x96xf32>
    %cst_33 = arith.constant dense<0.000000e+00> : vector<8xf32>
    %63 = vector.multi_reduction <add>, %62, %cst_33 [1] : vector<8x96xf32> to vector<8xf32>
    %64 = vector.shape_cast %63 : vector<8xf32> to vector<8x1xf32>
    %65 = arith.mulf %62, %62 : vector<8x96xf32>
    %cst_34 = arith.constant dense<0.000000e+00> : vector<8xf32>
    %66 = vector.multi_reduction <add>, %65, %cst_34 [1] : vector<8x96xf32> to vector<8xf32>
    %67 = vector.shape_cast %66 : vector<8xf32> to vector<8x1xf32>
    %68 = arith.addf %30, %64 : vector<8x1xf32>
    %69 = arith.addf %33, %67 : vector<8x1xf32>
    %c2 = arith.constant 2 : index
    %c0_35 = arith.constant 0 : index
    %c0_36 = arith.constant 0 : index
    %70 = vector.load %arg1[%c2, %c0_35, %c0_36] : memref<4x8x64xbf16, #tpu.memory_space<vmem>>, vector<1x8x64xbf16>
    %71 = vector.shape_cast %70 : vector<1x8x64xbf16> to vector<8x64xbf16>
    %c0_37 = arith.constant 0 : index
    %c0_38 = arith.constant 0 : index
    %72 = vector.load %arg2[%c0_37, %c0_38] : memref<64x96xbf16, #tpu.memory_space<vmem>>, vector<64x96xbf16>
    %cst_39 = arith.constant dense<0.000000e+00> : vector<8x96xf32>
    %73 = tpu.matmul %71, %72, %cst_39 {dimension_numbers = #tpu.dot_dimension_numbers<[1], [0], [0], [1], [0, 0, 1, 1], [], []>} : vector<8x64xbf16>, vector<64x96xbf16>, vector<8x96xf32> -> vector<8x96xf32>
    %c0_40 = arith.constant 0 : index
    %c0_41 = arith.constant 0 : index
    %74 = vector.load %arg3[%c0_40, %c0_41] : memref<1x96xf32, #tpu.memory_space<vmem>>, vector<1x96xf32>
    %75 = vector.broadcast %74 : vector<1x96xf32> to vector<8x96xf32>
    %76 = arith.addf %73, %75 : vector<8x96xf32>
    %c0_42 = arith.constant 0 : index
    %c0_43 = arith.constant 0 : index
    %77 = vector.load %arg4[%c0_42, %c0_43] : memref<1x96xf32, #tpu.memory_space<vmem>>, vector<1x96xf32>
    %c0_44 = arith.constant 0 : index
    %c0_45 = arith.constant 0 : index
    %78 = vector.load %arg5[%c0_44, %c0_45] : memref<1x96xf32, #tpu.memory_space<vmem>>, vector<1x96xf32>
    %cst_46 = arith.constant dense<0.000000e+00> : vector<8xf32>
    %79 = vector.multi_reduction <add>, %76, %cst_46 [1] : vector<8x96xf32> to vector<8xf32>
    %80 = vector.shape_cast %79 : vector<8xf32> to vector<8x1xf32>
    %cst_47 = arith.constant 9.600000e+01 : f32
    %81 = vector.broadcast %cst_47 : f32 to vector<8x1xf32>
    %82 = arith.divf %80, %81 : vector<8x1xf32>
    %83 = vector.broadcast %82 : vector<8x1xf32> to vector<8x96xf32>
    %84 = arith.subf %76, %83 : vector<8x96xf32>
    %85 = arith.mulf %84, %84 : vector<8x96xf32>
    %cst_48 = arith.constant dense<0.000000e+00> : vector<8xf32>
    %86 = vector.multi_reduction <add>, %85, %cst_48 [1] : vector<8x96xf32> to vector<8xf32>
    %87 = vector.shape_cast %86 : vector<8xf32> to vector<8x1xf32>
    %cst_49 = arith.constant 9.600000e+01 : f32
    %88 = vector.broadcast %cst_49 : f32 to vector<8x1xf32>
    %89 = arith.divf %87, %88 : vector<8x1xf32>
    %cst_50 = arith.constant 9.99999974E-6 : f32
    %90 = vector.broadcast %cst_50 : f32 to vector<8x1xf32>
    %91 = arith.addf %89, %90 : vector<8x1xf32>
    %92 = math.rsqrt %91 : vector<8x1xf32>
    %93 = vector.broadcast %92 : vector<8x1xf32> to vector<8x96xf32>
    %94 = arith.mulf %84, %93 : vector<8x96xf32>
    %95 = vector.broadcast %77 : vector<1x96xf32> to vector<8x96xf32>
    %96 = arith.mulf %94, %95 : vector<8x96xf32>
    %97 = vector.broadcast %78 : vector<1x96xf32> to vector<8x96xf32>
    %98 = arith.addf %96, %97 : vector<8x96xf32>
    %cst_51 = arith.constant dense<0.000000e+00> : vector<8xf32>
    %99 = vector.multi_reduction <add>, %98, %cst_51 [1] : vector<8x96xf32> to vector<8xf32>
    %100 = vector.shape_cast %99 : vector<8xf32> to vector<8x1xf32>
    %101 = arith.mulf %98, %98 : vector<8x96xf32>
    %cst_52 = arith.constant dense<0.000000e+00> : vector<8xf32>
    %102 = vector.multi_reduction <add>, %101, %cst_52 [1] : vector<8x96xf32> to vector<8xf32>
    %103 = vector.shape_cast %102 : vector<8xf32> to vector<8x1xf32>
    %104 = arith.addf %68, %100 : vector<8x1xf32>
    %105 = arith.addf %69, %103 : vector<8x1xf32>
    %c3 = arith.constant 3 : index
    %c0_53 = arith.constant 0 : index
    %c0_54 = arith.constant 0 : index
    %106 = vector.load %arg1[%c3, %c0_53, %c0_54] : memref<4x8x64xbf16, #tpu.memory_space<vmem>>, vector<1x8x64xbf16>
    %107 = vector.shape_cast %106 : vector<1x8x64xbf16> to vector<8x64xbf16>
    %c0_55 = arith.constant 0 : index
    %c0_56 = arith.constant 0 : index
    %108 = vector.load %arg2[%c0_55, %c0_56] : memref<64x96xbf16, #tpu.memory_space<vmem>>, vector<64x96xbf16>
    %cst_57 = arith.constant dense<0.000000e+00> : vector<8x96xf32>
    %109 = tpu.matmul %107, %108, %cst_57 {dimension_numbers = #tpu.dot_dimension_numbers<[1], [0], [0], [1], [0, 0, 1, 1], [], []>} : vector<8x64xbf16>, vector<64x96xbf16>, vector<8x96xf32> -> vector<8x96xf32>
    %c0_58 = arith.constant 0 : index
    %c0_59 = arith.constant 0 : index
    %110 = vector.load %arg3[%c0_58, %c0_59] : memref<1x96xf32, #tpu.memory_space<vmem>>, vector<1x96xf32>
    %111 = vector.broadcast %110 : vector<1x96xf32> to vector<8x96xf32>
    %112 = arith.addf %109, %111 : vector<8x96xf32>
    %c0_60 = arith.constant 0 : index
    %c0_61 = arith.constant 0 : index
    %113 = vector.load %arg4[%c0_60, %c0_61] : memref<1x96xf32, #tpu.memory_space<vmem>>, vector<1x96xf32>
    %c0_62 = arith.constant 0 : index
    %c0_63 = arith.constant 0 : index
    %114 = vector.load %arg5[%c0_62, %c0_63] : memref<1x96xf32, #tpu.memory_space<vmem>>, vector<1x96xf32>
    %cst_64 = arith.constant dense<0.000000e+00> : vector<8xf32>
    %115 = vector.multi_reduction <add>, %112, %cst_64 [1] : vector<8x96xf32> to vector<8xf32>
    %116 = vector.shape_cast %115 : vector<8xf32> to vector<8x1xf32>
    %cst_65 = arith.constant 9.600000e+01 : f32
    %117 = vector.broadcast %cst_65 : f32 to vector<8x1xf32>
    %118 = arith.divf %116, %117 : vector<8x1xf32>
    %119 = vector.broadcast %118 : vector<8x1xf32> to vector<8x96xf32>
    %120 = arith.subf %112, %119 : vector<8x96xf32>
    %121 = arith.mulf %120, %120 : vector<8x96xf32>
    %cst_66 = arith.constant dense<0.000000e+00> : vector<8xf32>
    %122 = vector.multi_reduction <add>, %121, %cst_66 [1] : vector<8x96xf32> to vector<8xf32>
    %123 = vector.shape_cast %122 : vector<8xf32> to vector<8x1xf32>
    %cst_67 = arith.constant 9.600000e+01 : f32
    %124 = vector.broadcast %cst_67 : f32 to vector<8x1xf32>
    %125 = arith.divf %123, %124 : vector<8x1xf32>
    %cst_68 = arith.constant 9.99999974E-6 : f32
    %126 = vector.broadcast %cst_68 : f32 to vector<8x1xf32>
    %127 = arith.addf %125, %126 : vector<8x1xf32>
    %128 = math.rsqrt %127 : vector<8x1xf32>
    %129 = vector.broadcast %128 : vector<8x1xf32> to vector<8x96xf32>
    %130 = arith.mulf %120, %129 : vector<8x96xf32>
    %131 = vector.broadcast %113 : vector<1x96xf32> to vector<8x96xf32>
    %132 = arith.mulf %130, %131 : vector<8x96xf32>
    %133 = vector.broadcast %114 : vector<1x96xf32> to vector<8x96xf32>
    %134 = arith.addf %132, %133 : vector<8x96xf32>
    %cst_69 = arith.constant dense<0.000000e+00> : vector<8xf32>
    %135 = vector.multi_reduction <add>, %134, %cst_69 [1] : vector<8x96xf32> to vector<8xf32>
    %136 = vector.shape_cast %135 : vector<8xf32> to vector<8x1xf32>
    %137 = arith.mulf %134, %134 : vector<8x96xf32>
    %cst_70 = arith.constant dense<0.000000e+00> : vector<8xf32>
    %138 = vector.multi_reduction <add>, %137, %cst_70 [1] : vector<8x96xf32> to vector<8xf32>
    %139 = vector.shape_cast %138 : vector<8xf32> to vector<8x1xf32>
    %140 = arith.addf %104, %136 : vector<8x1xf32>
    %141 = arith.addf %105, %139 : vector<8x1xf32>
    %cst_71 = arith.constant 3.840000e+02 : f32
    %142 = vector.broadcast %cst_71 : f32 to vector<8x1xf32>
    %143 = arith.divf %140, %142 : vector<8x1xf32>
    %cst_72 = arith.constant 3.840000e+02 : f32
    %144 = vector.broadcast %cst_72 : f32 to vector<8x1xf32>
    %145 = arith.divf %141, %144 : vector<8x1xf32>
    %146 = arith.mulf %143, %143 : vector<8x1xf32>
    %147 = arith.subf %145, %146 : vector<8x1xf32>
    %cst_73 = arith.constant 0.000000e+00 : f32
    %148 = vector.broadcast %cst_73 : f32 to vector<8x1xf32>
    %149 = arith.maximumf %147, %148 : vector<8x1xf32>
    %cst_74 = arith.constant 9.99999974E-6 : f32
    %150 = vector.broadcast %cst_74 : f32 to vector<8x1xf32>
    %151 = arith.addf %149, %150 : vector<8x1xf32>
    %152 = math.rsqrt %151 : vector<8x1xf32>
    %153 = vector.broadcast %143 : vector<8x1xf32> to vector<8x96xf32>
    %154 = arith.subf %28, %153 : vector<8x96xf32>
    %155 = vector.broadcast %152 : vector<8x1xf32> to vector<8x96xf32>
    %156 = arith.mulf %154, %155 : vector<8x96xf32>
    %c0_75 = arith.constant 0 : index
    %c0_76 = arith.constant 0 : index
    %c0_77 = arith.constant 0 : index
    %157 = vector.load %arg6[%c0_75, %c0_76, %c0_77] : memref<4x1x96xf32, #tpu.memory_space<vmem>>, vector<1x1x96xf32>
    %158 = vector.shape_cast %157 : vector<1x1x96xf32> to vector<1x96xf32>
    %159 = vector.broadcast %158 : vector<1x96xf32> to vector<8x96xf32>
    %160 = arith.mulf %156, %159 : vector<8x96xf32>
    %c0_78 = arith.constant 0 : index
    %c0_79 = arith.constant 0 : index
    %c0_80 = arith.constant 0 : index
    %161 = vector.load %arg7[%c0_78, %c0_79, %c0_80] : memref<4x1x96xf32, #tpu.memory_space<vmem>>, vector<1x1x96xf32>
    %162 = vector.shape_cast %161 : vector<1x1x96xf32> to vector<1x96xf32>
    %163 = vector.broadcast %162 : vector<1x96xf32> to vector<8x96xf32>
    %164 = arith.addf %160, %163 : vector<8x96xf32>
    %165 = arith.truncf %164 : vector<8x96xf32> to vector<8x96xbf16>
    %c0_81 = arith.constant 0 : index
    %c0_82 = arith.constant 0 : index
    %c0_83 = arith.constant 0 : index
    %166 = vector.load %arg8[%c0_81, %c0_82, %c0_83] : memref<4x96x192xbf16, #tpu.memory_space<vmem>>, vector<1x96x192xbf16>
    %167 = vector.shape_cast %166 : vector<1x96x192xbf16> to vector<96x192xbf16>
    %cst_84 = arith.constant dense<0.000000e+00> : vector<8x192xf32>
    %168 = tpu.matmul %165, %167, %cst_84 {dimension_numbers = #tpu.dot_dimension_numbers<[1], [0], [0], [1], [0, 0, 1, 1], [], []>} : vector<8x96xbf16>, vector<96x192xbf16>, vector<8x192xf32> -> vector<8x192xf32>
    %169 = vector.broadcast %143 : vector<8x1xf32> to vector<8x96xf32>
    %170 = arith.subf %62, %169 : vector<8x96xf32>
    %171 = vector.broadcast %152 : vector<8x1xf32> to vector<8x96xf32>
    %172 = arith.mulf %170, %171 : vector<8x96xf32>
    %c1_85 = arith.constant 1 : index
    %c0_86 = arith.constant 0 : index
    %c0_87 = arith.constant 0 : index
    %173 = vector.load %arg6[%c1_85, %c0_86, %c0_87] : memref<4x1x96xf32, #tpu.memory_space<vmem>>, vector<1x1x96xf32>
    %174 = vector.shape_cast %173 : vector<1x1x96xf32> to vector<1x96xf32>
    %175 = vector.broadcast %174 : vector<1x96xf32> to vector<8x96xf32>
    %176 = arith.mulf %172, %175 : vector<8x96xf32>
    %c1_88 = arith.constant 1 : index
    %c0_89 = arith.constant 0 : index
    %c0_90 = arith.constant 0 : index
    %177 = vector.load %arg7[%c1_88, %c0_89, %c0_90] : memref<4x1x96xf32, #tpu.memory_space<vmem>>, vector<1x1x96xf32>
    %178 = vector.shape_cast %177 : vector<1x1x96xf32> to vector<1x96xf32>
    %179 = vector.broadcast %178 : vector<1x96xf32> to vector<8x96xf32>
    %180 = arith.addf %176, %179 : vector<8x96xf32>
    %181 = arith.truncf %180 : vector<8x96xf32> to vector<8x96xbf16>
    %c1_91 = arith.constant 1 : index
    %c0_92 = arith.constant 0 : index
    %c0_93 = arith.constant 0 : index
    %182 = vector.load %arg8[%c1_91, %c0_92, %c0_93] : memref<4x96x192xbf16, #tpu.memory_space<vmem>>, vector<1x96x192xbf16>
    %183 = vector.shape_cast %182 : vector<1x96x192xbf16> to vector<96x192xbf16>
    %cst_94 = arith.constant dense<0.000000e+00> : vector<8x192xf32>
    %184 = tpu.matmul %181, %183, %cst_94 {dimension_numbers = #tpu.dot_dimension_numbers<[1], [0], [0], [1], [0, 0, 1, 1], [], []>} : vector<8x96xbf16>, vector<96x192xbf16>, vector<8x192xf32> -> vector<8x192xf32>
    %185 = arith.addf %168, %184 : vector<8x192xf32>
    %186 = vector.broadcast %143 : vector<8x1xf32> to vector<8x96xf32>
    %187 = arith.subf %98, %186 : vector<8x96xf32>
    %188 = vector.broadcast %152 : vector<8x1xf32> to vector<8x96xf32>
    %189 = arith.mulf %187, %188 : vector<8x96xf32>
    %c2_95 = arith.constant 2 : index
    %c0_96 = arith.constant 0 : index
    %c0_97 = arith.constant 0 : index
    %190 = vector.load %arg6[%c2_95, %c0_96, %c0_97] : memref<4x1x96xf32, #tpu.memory_space<vmem>>, vector<1x1x96xf32>
    %191 = vector.shape_cast %190 : vector<1x1x96xf32> to vector<1x96xf32>
    %192 = vector.broadcast %191 : vector<1x96xf32> to vector<8x96xf32>
    %193 = arith.mulf %189, %192 : vector<8x96xf32>
    %c2_98 = arith.constant 2 : index
    %c0_99 = arith.constant 0 : index
    %c0_100 = arith.constant 0 : index
    %194 = vector.load %arg7[%c2_98, %c0_99, %c0_100] : memref<4x1x96xf32, #tpu.memory_space<vmem>>, vector<1x1x96xf32>
    %195 = vector.shape_cast %194 : vector<1x1x96xf32> to vector<1x96xf32>
    %196 = vector.broadcast %195 : vector<1x96xf32> to vector<8x96xf32>
    %197 = arith.addf %193, %196 : vector<8x96xf32>
    %198 = arith.truncf %197 : vector<8x96xf32> to vector<8x96xbf16>
    %c2_101 = arith.constant 2 : index
    %c0_102 = arith.constant 0 : index
    %c0_103 = arith.constant 0 : index
    %199 = vector.load %arg8[%c2_101, %c0_102, %c0_103] : memref<4x96x192xbf16, #tpu.memory_space<vmem>>, vector<1x96x192xbf16>
    %200 = vector.shape_cast %199 : vector<1x96x192xbf16> to vector<96x192xbf16>
    %cst_104 = arith.constant dense<0.000000e+00> : vector<8x192xf32>
    %201 = tpu.matmul %198, %200, %cst_104 {dimension_numbers = #tpu.dot_dimension_numbers<[1], [0], [0], [1], [0, 0, 1, 1], [], []>} : vector<8x96xbf16>, vector<96x192xbf16>, vector<8x192xf32> -> vector<8x192xf32>
    %202 = arith.addf %185, %201 : vector<8x192xf32>
    %203 = vector.broadcast %143 : vector<8x1xf32> to vector<8x96xf32>
    %204 = arith.subf %134, %203 : vector<8x96xf32>
    %205 = vector.broadcast %152 : vector<8x1xf32> to vector<8x96xf32>
    %206 = arith.mulf %204, %205 : vector<8x96xf32>
    %c3_105 = arith.constant 3 : index
    %c0_106 = arith.constant 0 : index
    %c0_107 = arith.constant 0 : index
    %207 = vector.load %arg6[%c3_105, %c0_106, %c0_107] : memref<4x1x96xf32, #tpu.memory_space<vmem>>, vector<1x1x96xf32>
    %208 = vector.shape_cast %207 : vector<1x1x96xf32> to vector<1x96xf32>
    %209 = vector.broadcast %208 : vector<1x96xf32> to vector<8x96xf32>
    %210 = arith.mulf %206, %209 : vector<8x96xf32>
    %c3_108 = arith.constant 3 : index
    %c0_109 = arith.constant 0 : index
    %c0_110 = arith.constant 0 : index
    %211 = vector.load %arg7[%c3_108, %c0_109, %c0_110] : memref<4x1x96xf32, #tpu.memory_space<vmem>>, vector<1x1x96xf32>
    %212 = vector.shape_cast %211 : vector<1x1x96xf32> to vector<1x96xf32>
    %213 = vector.broadcast %212 : vector<1x96xf32> to vector<8x96xf32>
    %214 = arith.addf %210, %213 : vector<8x96xf32>
    %215 = arith.truncf %214 : vector<8x96xf32> to vector<8x96xbf16>
    %c3_111 = arith.constant 3 : index
    %c0_112 = arith.constant 0 : index
    %c0_113 = arith.constant 0 : index
    %216 = vector.load %arg8[%c3_111, %c0_112, %c0_113] : memref<4x96x192xbf16, #tpu.memory_space<vmem>>, vector<1x96x192xbf16>
    %217 = vector.shape_cast %216 : vector<1x96x192xbf16> to vector<96x192xbf16>
    %cst_114 = arith.constant dense<0.000000e+00> : vector<8x192xf32>
    %218 = tpu.matmul %215, %217, %cst_114 {dimension_numbers = #tpu.dot_dimension_numbers<[1], [0], [0], [1], [0, 0, 1, 1], [], []>} : vector<8x96xbf16>, vector<96x192xbf16>, vector<8x192xf32> -> vector<8x192xf32>
    %219 = arith.addf %202, %218 : vector<8x192xf32>
    %c0_115 = arith.constant 0 : index
    %c0_116 = arith.constant 0 : index
    %220 = vector.load %arg9[%c0_115, %c0_116] : memref<1x192xf32, #tpu.memory_space<vmem>>, vector<1x192xf32>
    %c0_117 = arith.constant 0 : index
    %c0_118 = arith.constant 0 : index
    %221 = vector.load %arg10[%c0_117, %c0_118] : memref<1x192xf32, #tpu.memory_space<vmem>>, vector<1x192xf32>
    %cst_119 = arith.constant dense<0.000000e+00> : vector<8xf32>
    %222 = vector.multi_reduction <add>, %219, %cst_119 [1] : vector<8x192xf32> to vector<8xf32>
    %223 = vector.shape_cast %222 : vector<8xf32> to vector<8x1xf32>
    %cst_120 = arith.constant 1.920000e+02 : f32
    %224 = vector.broadcast %cst_120 : f32 to vector<8x1xf32>
    %225 = arith.divf %223, %224 : vector<8x1xf32>
    %226 = vector.broadcast %225 : vector<8x1xf32> to vector<8x192xf32>
    %227 = arith.subf %219, %226 : vector<8x192xf32>
    %228 = arith.mulf %227, %227 : vector<8x192xf32>
    %cst_121 = arith.constant dense<0.000000e+00> : vector<8xf32>
    %229 = vector.multi_reduction <add>, %228, %cst_121 [1] : vector<8x192xf32> to vector<8xf32>
    %230 = vector.shape_cast %229 : vector<8xf32> to vector<8x1xf32>
    %cst_122 = arith.constant 1.920000e+02 : f32
    %231 = vector.broadcast %cst_122 : f32 to vector<8x1xf32>
    %232 = arith.divf %230, %231 : vector<8x1xf32>
    %cst_123 = arith.constant 9.99999974E-6 : f32
    %233 = vector.broadcast %cst_123 : f32 to vector<8x1xf32>
    %234 = arith.addf %232, %233 : vector<8x1xf32>
    %235 = math.rsqrt %234 : vector<8x1xf32>
    %236 = vector.broadcast %235 : vector<8x1xf32> to vector<8x192xf32>
    %237 = arith.mulf %227, %236 : vector<8x192xf32>
    %238 = vector.broadcast %220 : vector<1x192xf32> to vector<8x192xf32>
    %239 = arith.mulf %237, %238 : vector<8x192xf32>
    %240 = vector.broadcast %221 : vector<1x192xf32> to vector<8x192xf32>
    %241 = arith.addf %239, %240 : vector<8x192xf32>
    %242 = arith.truncf %241 : vector<8x192xf32> to vector<8x192xbf16>
    %c0_124 = arith.constant 0 : index
    %c0_125 = arith.constant 0 : index
    %243 = vector.load %arg11[%c0_124, %c0_125] : memref<8x192xbf16, #tpu.memory_space<vmem>>, vector<8x192xbf16>
    tpu.vector_store %arg11[%c0_124, %c0_125], %242 {strides = array<i32>} : memref<8x192xbf16, #tpu.memory_space<vmem>>, vector<8x192xbf16>,
    return
  }
  func.func @transform_0(%arg0: i32) -> (i32, i32, i32) {
    %c0_i32 = arith.constant 0 : i32
    %c0_i32_0 = arith.constant 0 : i32
    %c0_i32_1 = arith.constant 0 : i32
    return %c0_i32, %arg0, %c0_i32_0 : i32, i32, i32
  }
  func.func @transform_1(%arg0: i32) -> (i32, i32) {
    %c0_i32 = arith.constant 0 : i32
    %c0_i32_0 = arith.constant 0 : i32
    %c0_i32_1 = arith.constant 0 : i32
    return %c0_i32, %c0_i32_0 : i32, i32
  }
  func.func @transform_2(%arg0: i32) -> (i32, i32) {
    %c0_i32 = arith.constant 0 : i32
    %c0_i32_0 = arith.constant 0 : i32
    %c0_i32_1 = arith.constant 0 : i32
    return %c0_i32, %c0_i32_0 : i32, i32
  }
  func.func @transform_3(%arg0: i32) -> (i32, i32) {
    %c0_i32 = arith.constant 0 : i32
    %c0_i32_0 = arith.constant 0 : i32
    %c0_i32_1 = arith.constant 0 : i32
    return %c0_i32, %c0_i32_0 : i32, i32
  }
  func.func @transform_4(%arg0: i32) -> (i32, i32) {
    %c0_i32 = arith.constant 0 : i32
    %c0_i32_0 = arith.constant 0 : i32
    %c0_i32_1 = arith.constant 0 : i32
    return %c0_i32, %c0_i32_0 : i32, i32
  }
  func.func @transform_5(%arg0: i32) -> (i32, i32, i32) {
    %c0_i32 = arith.constant 0 : i32
    %c0_i32_0 = arith.constant 0 : i32
    %c0_i32_1 = arith.constant 0 : i32
    %c0_i32_2 = arith.constant 0 : i32
    return %c0_i32, %c0_i32_0, %c0_i32_1 : i32, i32, i32
  }
  func.func @transform_6(%arg0: i32) -> (i32, i32, i32) {
    %c0_i32 = arith.constant 0 : i32
    %c0_i32_0 = arith.constant 0 : i32
    %c0_i32_1 = arith.constant 0 : i32
    %c0_i32_2 = arith.constant 0 : i32
    return %c0_i32, %c0_i32_0, %c0_i32_1 : i32, i32, i32
  }
  func.func @transform_7(%arg0: i32) -> (i32, i32, i32) {
    %c0_i32 = arith.constant 0 : i32
    %c0_i32_0 = arith.constant 0 : i32
    %c0_i32_1 = arith.constant 0 : i32
    %c0_i32_2 = arith.constant 0 : i32
    return %c0_i32, %c0_i32_0, %c0_i32_1 : i32, i32, i32
  }
  func.func @transform_8(%arg0: i32) -> (i32, i32) {
    %c0_i32 = arith.constant 0 : i32
    %c0_i32_0 = arith.constant 0 : i32
    %c0_i32_1 = arith.constant 0 : i32
    return %c0_i32, %c0_i32_0 : i32, i32
  }
  func.func @transform_9(%arg0: i32) -> (i32, i32) {
    %c0_i32 = arith.constant 0 : i32
    %c0_i32_0 = arith.constant 0 : i32
    %c0_i32_1 = arith.constant 0 : i32
    return %c0_i32, %c0_i32_0 : i32, i32
  }
  func.func @transform_10(%arg0: i32) -> (i32, i32) {
    %c0_i32 = arith.constant 0 : i32
    %c0_i32_0 = arith.constant 0 : i32
    return %arg0, %c0_i32 : i32, i32
  }
}

</mosaic_0001>

<llo_original>
// kernel: tpu_custom_call.1
$region0: #{tpu_custom_call.1}
  #allocation0 [shape = 'u32[]', space=smem, size = 0x4, offset = 0x4, fixed_abs, tag = 'smem constant byte address 0x4 - core index']
  #allocation1 [shape = 'u32[144,128]{1,0:T(1,128)}', space=vmem, size = 0x12000, scoped, tag = 'internal scratch']
  %s0 = inlined_call_operand.hbm [shape: bf16[4,8,64], index: 0, kind: input, shape index: {}]
  %s1 = inlined_call_operand.hbm [shape: bf16[64,96], index: 1, kind: input, shape index: {}]
  %s2 = inlined_call_operand.vmem [shape: f32[1,96], index: 2, kind: input, shape index: {}]
  %s3 = inlined_call_operand.hbm [shape: f32[1,96], index: 3, kind: input, shape index: {}]
  %s4 = inlined_call_operand.vmem [shape: f32[1,96], index: 4, kind: input, shape index: {}]
  %s5 = inlined_call_operand.vmem [shape: f32[4,1,96], index: 5, kind: input, shape index: {}]
  %s6 = inlined_call_operand.vmem [shape: f32[4,1,96], index: 6, kind: input, shape index: {}]
  %s7 = inlined_call_operand.hbm [shape: bf16[4,96,192], index: 7, kind: input, shape index: {}]
  %s8 = inlined_call_operand.vmem [shape: f32[1,192], index: 8, kind: input, shape index: {}]
  %s9 = inlined_call_operand.vmem [shape: f32[1,192], index: 9, kind: input, shape index: {}]
  %s10 = inlined_call_operand.hbm [shape: bf16[8,192], index: 10, kind: output, shape index: {}]
  %s11 = sld [smem:[#allocation0]]
  $region66: #{tpu_custom_call.1} parent=0
    _
  %s13 = ssub.s32 1, %s11
  %s14 = scalar_select 0, %s13, %s11
  $region1: #{tpu_custom_call.1} parent=0
    #allocation2 [shape = 'u8[8192]{0}', space=vmem, size = 0x2000, scoped, tag = 'input window, operand 0, single buffered']
    #allocation3 [shape = 's32[1]{0}', space=sflag, size = 0x4, scoped, tag = 'scoped memory for tpu_custom_call.1']
    #allocation4 [shape = 's32[1]{0}', space=sflag, size = 0x4, scoped, tag = 'scoped memory for tpu_custom_call.1']
    #allocation5 [shape = 'u8[16384]{0}', space=vmem, size = 0x4000, scoped, tag = 'input window, operand 1, single buffered']
    #allocation6 [shape = 's32[1]{0}', space=sflag, size = 0x4, scoped, tag = 'scoped memory for tpu_custom_call.1']
    #allocation7 [shape = 'u8[512]{0}', space=vmem, size = 0x400, scoped, tag = 'input window, operand 3, single buffered']
    #allocation8 [shape = 'u8[196608]{0}', space=vmem, size = 0x30000, scoped, tag = 'input window, operand 7, single buffered']
    #allocation9 [shape = 's32[1]{0}', space=sflag, size = 0x4, scoped, tag = 'scoped memory for tpu_custom_call.1']
    #allocation10 [shape = 'u8[4096]{0}', space=vmem, size = 0x1000, scoped, tag = 'output window, operand 0, single buffered']
    %15 = vsyncpa [#allocation3], 0
    %16 = vsyncpa [#allocation6], 0
    %17 = vsyncpa [#allocation9], 0
    %18 = vsyncpa [#allocation4], 0
    // Predicated region
    $region2: #{tpu_custom_call.1} parent=1 // pred_check
      _
    $region3: #{tpu_custom_call.1} parent=1 // pred_check_branch
      %20 = sbr.rel (0) target = $region5
    $region4: #{tpu_custom_call.1} parent=1 // pred_region
      %s22 = ssub.s32 256, 256
      %23 = vsyncadd [#allocation3], %s22
      %s24 = sshll.u32 [#allocation2], 4
      %s25 = int_to_ptr.vmem [resolvable:$true] %s24
      %30 = dma.hbm_to_vmem [thread:$0]  %s0, 256, %s25, [#allocation3], 64, 64, 4
    $region5: #{tpu_custom_call.1} parent=1 // pred_fallthru
      _
    // Predicated region
    $region6: #{tpu_custom_call.1} parent=1 // pred_check
      _
    $region7: #{tpu_custom_call.1} parent=1 // pred_check_branch
      %32 = sbr.rel (0) target = $region9
    $region8: #{tpu_custom_call.1} parent=1 // pred_region
      %s34 = ssub.s32 512, 512
      %35 = vsyncadd [#allocation6], %s34
      %s36 = sshll.u32 [#allocation5], 4
      %s37 = int_to_ptr.vmem [resolvable:$true] %s36
      %42 = dma.hbm_to_vmem [thread:$0]  %s1, 512, %s37, [#allocation6], 64, 64, 4
    $region9: #{tpu_custom_call.1} parent=1 // pred_fallthru
      _
    // Predicated region
    $region10: #{tpu_custom_call.1} parent=1 // pred_check
      _
    $region11: #{tpu_custom_call.1} parent=1 // pred_check_branch
      %44 = sbr.rel (0) target = $region13
    $region12: #{tpu_custom_call.1} parent=1 // pred_region
      _
    $region13: #{tpu_custom_call.1} parent=1 // pred_fallthru
      _
    // Predicated region
    $region14: #{tpu_custom_call.1} parent=1 // pred_check
      _
    $region15: #{tpu_custom_call.1} parent=1 // pred_check_branch
      %46 = sbr.rel (0) target = $region17
    $region16: #{tpu_custom_call.1} parent=1 // pred_region
      %s48 = ssub.s32 16, 16
      %49 = vsyncadd [#allocation6], %s48
      %s51 = sshll.u32 [#allocation7], 4
      %s52 = int_to_ptr.vmem [resolvable:$true] %s51
      %54 = dma.hbm_to_vmem [thread:$0]  %s3, 16, %s52, [#allocation6]
    $region17: #{tpu_custom_call.1} parent=1 // pred_fallthru
      _
    // Predicated region
    $region18: #{tpu_custom_call.1} parent=1 // pred_check
      _
    $region19: #{tpu_custom_call.1} parent=1 // pred_check_branch
      %56 = sbr.rel (0) target = $region21
    $region20: #{tpu_custom_call.1} parent=1 // pred_region
      _
    $region21: #{tpu_custom_call.1} parent=1 // pred_fallthru
      _
    // Predicated region
    $region22: #{tpu_custom_call.1} parent=1 // pred_check
      _
    $region23: #{tpu_custom_call.1} parent=1 // pred_check_branch
      %58 = sbr.rel (0) target = $region25
    $region24: #{tpu_custom_call.1} parent=1 // pred_region
      _
    $region25: #{tpu_custom_call.1} parent=1 // pred_fallthru
      _
    // Predicated region
    $region26: #{tpu_custom_call.1} parent=1 // pred_check
      _
    $region27: #{tpu_custom_call.1} parent=1 // pred_check_branch
      %60 = sbr.rel (0) target = $region29
    $region28: #{tpu_custom_call.1} parent=1 // pred_region
      _
    $region29: #{tpu_custom_call.1} parent=1 // pred_fallthru
      _
    // Predicated region
    $region30: #{tpu_custom_call.1} parent=1 // pred_check
      _
    $region31: #{tpu_custom_call.1} parent=1 // pred_check_branch
      %62 = sbr.rel (0) target = $region33
    $region32: #{tpu_custom_call.1} parent=1 // pred_region
      %s64 = ssub.s32 6144, 6144
      %65 = vsyncadd [#allocation9], %s64
      %s66 = sshll.u32 [#allocation8], 4
      %s67 = int_to_ptr.vmem [resolvable:$true] %s66
      %72 = dma.hbm_to_vmem [thread:$0]  %s7, 6144, %s67, [#allocation9], 128, 128, 8
    $region33: #{tpu_custom_call.1} parent=1 // pred_fallthru
      _
    // Predicated region
    $region34: #{tpu_custom_call.1} parent=1 // pred_check
      _
    $region35: #{tpu_custom_call.1} parent=1 // pred_check_branch
      %74 = sbr.rel (0) target = $region37
    $region36: #{tpu_custom_call.1} parent=1 // pred_region
      _
    $region37: #{tpu_custom_call.1} parent=1 // pred_fallthru
      _
    // Predicated region
    $region38: #{tpu_custom_call.1} parent=1 // pred_check
      _
    $region39: #{tpu_custom_call.1} parent=1 // pred_check_branch
      %76 = sbr.rel (0) target = $region41
    $region40: #{tpu_custom_call.1} parent=1 // pred_region
      _
    $region41: #{tpu_custom_call.1} parent=1 // pred_fallthru
      _
    // Predicated region
    $region42: #{tpu_custom_call.1} parent=1 // pred_check
      _
    $region43: #{tpu_custom_call.1} parent=1 // pred_check_branch
      %78 = sbr.rel (0) target = $region45
    $region44: #{tpu_custom_call.1} parent=1 // pred_region
      %79 = dma.done [#allocation3], 256
    $region45: #{tpu_custom_call.1} parent=1 // pred_fallthru
      _
    // Predicated region
    $region46: #{tpu_custom_call.1} parent=1 // pred_check
      _
    $region47: #{tpu_custom_call.1} parent=1 // pred_check_branch
      %81 = sbr.rel (0) target = $region49
    $region48: #{tpu_custom_call.1} parent=1 // pred_region
      %82 = dma.done [#allocation6], 512
    $region49: #{tpu_custom_call.1} parent=1 // pred_fallthru
      _
    // Predicated region
    $region50: #{tpu_custom_call.1} parent=1 // pred_check
      _
    $region51: #{tpu_custom_call.1} parent=1 // pred_check_branch
      %84 = sbr.rel (0) target = $region53
    $region52: #{tpu_custom_call.1} parent=1 // pred_region
      %85 = dma.done [#allocation6], 16
    $region53: #{tpu_custom_call.1} parent=1 // pred_fallthru
      _
    // Predicated region
    $region54: #{tpu_custom_call.1} parent=1 // pred_check
      _
    $region55: #{tpu_custom_call.1} parent=1 // pred_check_branch
      %87 = sbr.rel (0) target = $region57
    $region56: #{tpu_custom_call.1} parent=1 // pred_region
      %88 = dma.done [#allocation9], 6144
    $region57: #{tpu_custom_call.1} parent=1 // pred_fallthru
      _
    %v90 = vld [vmem:[#allocation2] sm:$0xf]
    %v91 = vld [vmem:[#allocation5] sm:$0xf]
    %v92 = vld [vmem:[#allocation5 + $0x4] sm:$0xf]
    %v93 = vld [vmem:[#allocation5 + $0x8] sm:$0xf]
    %v94 = vld [vmem:[#allocation5 + $0xc] sm:$0xf]
    %v95 = vld [vmem:[#allocation5 + $0x10] sm:$0xf]
    %v96 = vld [vmem:[#allocation5 + $0x14] sm:$0xf]
    %v97 = vld [vmem:[#allocation5 + $0x18] sm:$0xf]
    %v98 = vld [vmem:[#allocation5 + $0x1c] sm:$0xf]
    %v99 = vld [vmem:[%s2] sm:$0x1]
    %v101 = vlaneseq
    %v102 = vshrl.u32 %v101, 7
    %v103 = vsub.s32 0, %v102
    %v104 = vrot.slane %v99, %v103
    %v114 = vunpack.c.l.b16 %v91
    %v115 = vunpack.c.l.b16 %v92
    %v116 = vunpack.c.l.b16 %v93
    %v117 = vunpack.c.l.b16 %v94
    %v118 = vunpack.c.l.b16 %v95
    %v119 = vunpack.c.l.b16 %v96
    %v120 = vunpack.c.l.b16 %v97
    %v121 = vunpack.c.l.b16 %v98
    %v122 = vpack.c.b16 %v115, %v114
    %v123 = vpack.c.b16 %v117, %v116
    %v124 = vpack.c.b16 %v119, %v118
    %v125 = vpack.c.b16 %v121, %v120
    %vm130 = vcmask 523264
    %v132 = vsel %vm130, %v90, 0
    %134 = vmatprep.subr.bf16.mxu0 0
    %135 = vmatpush1.bf16.msra.mxu0 %v122
    %136 = vmatprep.subr.bf16.mxu0 0
    %137 = vmatpush1.bf16.msra.mxu0 %v123
    %138 = vmatprep.subr.bf16.mxu0 0
    %139 = vmatpush1.bf16.msra.mxu0 %v124
    %140 = vmatprep.subr.bf16.mxu0 0
    %141 = vmatpush1.bf16.msra.mxu0 %v125
    %142 = vmatprep.subr.bf16.mxu0 0
    %143 = vmatpush1.bf16.msra.mxu0 0
    %144 = vmatprep.subr.bf16.mxu0 0
    %145 = vmatpush1.bf16.msra.mxu0 0
    %146 = vmatprep.subr.bf16.mxu0 0
    %147 = vmatpush1.bf16.msra.mxu0 0
    %148 = vmatprep.subr.bf16.mxu0 0
    %149 = vmatpush1.bf16.msra.mxu0 0
    %150 = vmatprep.subr.bf16.mxu0 0
    %151 = vmatpush1.bf16.msra.mxu0 0
    %152 = vmatprep.subr.bf16.mxu0 0
    %153 = vmatpush1.bf16.msra.mxu0 0
    %154 = vmatprep.subr.bf16.mxu0 0
    %155 = vmatpush1.bf16.msra.mxu0 0
    %156 = vmatprep.subr.bf16.mxu0 0
    %157 = vmatpush1.bf16.msra.mxu0 0
    %158 = vmatprep.subr.bf16.mxu0 0
    %159 = vmatpush1.bf16.msra.mxu0 0
    %160 = vmatprep.subr.bf16.mxu0 0
    %161 = vmatpush1.bf16.msra.mxu0 0
    %162 = vmatprep.subr.bf16.mxu0 0
    %163 = vmatpush1.bf16.msra.mxu0 0
    %164 = vmatprep.subr.bf16.mxu0 0
    %165 = vmatpush1.bf16.msra.mxu0 0
    %166 = vmatprep.mubr.bf16.mxu0 0
    %167 = vmatmul.mubr.bf16.gmra.mrb[0].mxu0 %v132
    %v168 = vpop.f32.mrb[0].mxu0
    %v169 = vadd.f32 %v104, %v168
    %v170 = vpop.f32.mrb[0].mxu0
    %v171 = vpop.f32.mrb[0].mxu0
    %v172 = vpop.f32.mrb[0].mxu0
    %173 = vdwg.mxu0
    %v174 = vld [vmem:[#allocation7] sm:$0x1]
    %v175 = vld [vmem:[%s4] sm:$0x1]
    %vm176 = vcmask 785408
    %v177 = vsel %vm176, %v169, 0.0
    %178 = vadd.xlane.f32.xlu0 %v177
    %v179 = vpop.xlane.xlu0 %178
    %v180 = vrcp.pop 96.0
    %v181 = vmul.f32 %v179, %v180
    %v182 = vsub.f32 %v169, %v181
    %v183 = vmul.f32 %v182, %v182
    %v184 = vsel %vm176, %v183, 0.0
    %185 = vadd.xlane.f32.xlu0 %v184
    %v186 = vpop.xlane.xlu0 %185
    %v187 = vmul.f32 %v186, %v180
    %v188 = vadd.f32 %v187, 1e-05
    %v189 = vrsqrt.pop %v188
    %v190 = vmul.f32 %v182, %v189
    %v192 = vlaneseq
    %v193 = vshrl.u32 %v192, 7
    %v194 = vsub.s32 0, %v193
    %v195 = vrot.slane %v174, %v194
    %v197 = vmul.f32 %v190, %v195
    %v199 = vlaneseq
    %v200 = vshrl.u32 %v199, 7
    %v201 = vsub.s32 0, %v200
    %v202 = vrot.slane %v175, %v201
    %v204 = vadd.f32 %v197, %v202
    %v205 = vsel %vm176, %v204, 0.0
    %206 = vadd.xlane.f32.xlu0 %v205
    %v207 = vpop.xlane.xlu0 %206
    %v208 = vmul.f32 %v204, %v204
    %v209 = vsel %vm176, %v208, 0.0
    %210 = vadd.xlane.f32.xlu0 %v209
    %v211 = vpop.xlane.xlu0 %210
    %s212 = scalar_lea.vmem [#allocation2], 4
    %v213 = vld [vmem:[%s212] sm:$0xf]
    %v215 = vsel %vm130, %v213, 0
    %217 = vmatprep.subr.bf16.mxu0 0
    %218 = vmatpush1.bf16.msra.mxu0 %v122
    %219 = vmatprep.subr.bf16.mxu0 0
    %220 = vmatpush1.bf16.msra.mxu0 %v123
    %221 = vmatprep.subr.bf16.mxu0 0
    %222 = vmatpush1.bf16.msra.mxu0 %v124
    %223 = vmatprep.subr.bf16.mxu0 0
    %224 = vmatpush1.bf16.msra.mxu0 %v125
    %225 = vmatprep.subr.bf16.mxu0 0
    %226 = vmatpush1.bf16.msra.mxu0 0
    %227 = vmatprep.subr.bf16.mxu0 0
    %228 = vmatpush1.bf16.msra.mxu0 0
    %229 = vmatprep.subr.bf16.mxu0 0
    %230 = vmatpush1.bf16.msra.mxu0 0
    %231 = vmatprep.subr.bf16.mxu0 0
    %232 = vmatpush1.bf16.msra.mxu0 0
    %233 = vmatprep.subr.bf16.mxu0 0
    %234 = vmatpush1.bf16.msra.mxu0 0
    %235 = vmatprep.subr.bf16.mxu0 0
    %236 = vmatpush1.bf16.msra.mxu0 0
    %237 = vmatprep.subr.bf16.mxu0 0
    %238 = vmatpush1.bf16.msra.mxu0 0
    %239 = vmatprep.subr.bf16.mxu0 0
    %240 = vmatpush1.bf16.msra.mxu0 0
    %241 = vmatprep.subr.bf16.mxu0 0
    %242 = vmatpush1.bf16.msra.mxu0 0
    %243 = vmatprep.subr.bf16.mxu0 0
    %244 = vmatpush1.bf16.msra.mxu0 0
    %245 = vmatprep.subr.bf16.mxu0 0
    %246 = vmatpush1.bf16.msra.mxu0 0
    %247 = vmatprep.subr.bf16.mxu0 0
    %248 = vmatpush1.bf16.msra.mxu0 0
    %249 = vmatprep.mubr.bf16.mxu0 0
    %250 = vmatmul.mubr.bf16.gmra.mrb[0].mxu0 %v215
    %v251 = vpop.f32.mrb[0].mxu0
    %v252 = vadd.f32 %v104, %v251
    %v253 = vpop.f32.mrb[0].mxu0
    %v254 = vpop.f32.mrb[0].mxu0
    %v255 = vpop.f32.mrb[0].mxu0
    %256 = vdwg.mxu0
    %v257 = vsel %vm176, %v252, 0.0
    %258 = vadd.xlane.f32.xlu0 %v257
    %v259 = vpop.xlane.xlu0 %258
    %v260 = vmul.f32 %v259, %v180
    %v261 = vsub.f32 %v252, %v260
    %v262 = vmul.f32 %v261, %v261
    %v263 = vsel %vm176, %v262, 0.0
    %264 = vadd.xlane.f32.xlu0 %v263
    %v265 = vpop.xlane.xlu0 %264
    %v266 = vmul.f32 %v265, %v180
    %v267 = vadd.f32 %v266, 1e-05
    %v268 = vrsqrt.pop %v267
    %v269 = vmul.f32 %v261, %v268
    %v270 = vmul.f32 %v269, %v195
    %v271 = vadd.f32 %v270, %v202
    %v272 = vsel %vm176, %v271, 0.0
    %273 = vadd.xlane.f32.xlu0 %v272
    %v274 = vpop.xlane.xlu0 %273
    %v275 = vmul.f32 %v271, %v271
    %v276 = vsel %vm176, %v275, 0.0
    %277 = vadd.xlane.f32.xlu0 %v276
    %v278 = vpop.xlane.xlu0 %277
    %v279 = vadd.f32 %v207, %v274
    %v280 = vadd.f32 %v211, %v278
    %s281 = scalar_lea.vmem [#allocation2], 8
    %v282 = vld [vmem:[%s281] sm:$0xf]
    %v284 = vsel %vm130, %v282, 0
    %286 = vmatprep.subr.bf16.mxu0 0
    %287 = vmatpush1.bf16.msra.mxu0 %v122
    %288 = vmatprep.subr.bf16.mxu0 0
    %289 = vmatpush1.bf16.msra.mxu0 %v123
    %290 = vmatprep.subr.bf16.mxu0 0
    %291 = vmatpush1.bf16.msra.mxu0 %v124
    %292 = vmatprep.subr.bf16.mxu0 0
    %293 = vmatpush1.bf16.msra.mxu0 %v125
    %294 = vmatprep.subr.bf16.mxu0 0
    %295 = vmatpush1.bf16.msra.mxu0 0
    %296 = vmatprep.subr.bf16.mxu0 0
    %297 = vmatpush1.bf16.msra.mxu0 0
    %298 = vmatprep.subr.bf16.mxu0 0
    %299 = vmatpush1.bf16.msra.mxu0 0
    %300 = vmatprep.subr.bf16.mxu0 0
    %301 = vmatpush1.bf16.msra.mxu0 0
    %302 = vmatprep.subr.bf16.mxu0 0
    %303 = vmatpush1.bf16.msra.mxu0 0
    %304 = vmatprep.subr.bf16.mxu0 0
    %305 = vmatpush1.bf16.msra.mxu0 0
    %306 = vmatprep.subr.bf16.mxu0 0
    %307 = vmatpush1.bf16.msra.mxu0 0
    %308 = vmatprep.subr.bf16.mxu0 0
    %309 = vmatpush1.bf16.msra.mxu0 0
    %310 = vmatprep.subr.bf16.mxu0 0
    %311 = vmatpush1.bf16.msra.mxu0 0
    %312 = vmatprep.subr.bf16.mxu0 0
    %313 = vmatpush1.bf16.msra.mxu0 0
    %314 = vmatprep.subr.bf16.mxu0 0
    %315 = vmatpush1.bf16.msra.mxu0 0
    %316 = vmatprep.subr.bf16.mxu0 0
    %317 = vmatpush1.bf16.msra.mxu0 0
    %318 = vmatprep.mubr.bf16.mxu0 0
    %319 = vmatmul.mubr.bf16.gmra.mrb[0].mxu0 %v284
    %v320 = vpop.f32.mrb[0].mxu0
    %v321 = vadd.f32 %v104, %v320
    %v322 = vpop.f32.mrb[0].mxu0
    %v323 = vpop.f32.mrb[0].mxu0
    %v324 = vpop.f32.mrb[0].mxu0
    %325 = vdwg.mxu0
    %v326 = vsel %vm176, %v321, 0.0
    %327 = vadd.xlane.f32.xlu0 %v326
    %v328 = vpop.xlane.xlu0 %327
    %v329 = vmul.f32 %v328, %v180
    %v330 = vsub.f32 %v321, %v329
    %v331 = vmul.f32 %v330, %v330
    %v332 = vsel %vm176, %v331, 0.0
    %333 = vadd.xlane.f32.xlu0 %v332
    %v334 = vpop.xlane.xlu0 %333
    %v335 = vmul.f32 %v334, %v180
    %v336 = vadd.f32 %v335, 1e-05
    %v337 = vrsqrt.pop %v336
    %v338 = vmul.f32 %v330, %v337
    %v339 = vmul.f32 %v338, %v195
    %v340 = vadd.f32 %v339, %v202
    %v341 = vsel %vm176, %v340, 0.0
    %342 = vadd.xlane.f32.xlu0 %v341
    %v343 = vpop.xlane.xlu0 %342
    %v344 = vmul.f32 %v340, %v340
    %v345 = vsel %vm176, %v344, 0.0
    %346 = vadd.xlane.f32.xlu0 %v345
    %v347 = vpop.xlane.xlu0 %346
    %v348 = vadd.f32 %v279, %v343
    %v349 = vadd.f32 %v280, %v347
    %s350 = scalar_lea.vmem [#allocation2], 12
    %v351 = vld [vmem:[%s350] sm:$0xf]
    %v353 = vsel %vm130, %v351, 0
    %355 = vmatprep.subr.bf16.mxu0 0
    %356 = vmatpush1.bf16.msra.mxu0 %v122
    %357 = vmatprep.subr.bf16.mxu0 0
    %358 = vmatpush1.bf16.msra.mxu0 %v123
    %359 = vmatprep.subr.bf16.mxu0 0
    %360 = vmatpush1.bf16.msra.mxu0 %v124
    %361 = vmatprep.subr.bf16.mxu0 0
    %362 = vmatpush1.bf16.msra.mxu0 %v125
    %363 = vmatprep.subr.bf16.mxu0 0
    %364 = vmatpush1.bf16.msra.mxu0 0
    %365 = vmatprep.subr.bf16.mxu0 0
    %366 = vmatpush1.bf16.msra.mxu0 0
    %367 = vmatprep.subr.bf16.mxu0 0
    %368 = vmatpush1.bf16.msra.mxu0 0
    %369 = vmatprep.subr.bf16.mxu0 0
    %370 = vmatpush1.bf16.msra.mxu0 0
    %371 = vmatprep.subr.bf16.mxu0 0
    %372 = vmatpush1.bf16.msra.mxu0 0
    %373 = vmatprep.subr.bf16.mxu0 0
    %374 = vmatpush1.bf16.msra.mxu0 0
    %375 = vmatprep.subr.bf16.mxu0 0
    %376 = vmatpush1.bf16.msra.mxu0 0
    %377 = vmatprep.subr.bf16.mxu0 0
    %378 = vmatpush1.bf16.msra.mxu0 0
    %379 = vmatprep.subr.bf16.mxu0 0
    %380 = vmatpush1.bf16.msra.mxu0 0
    %381 = vmatprep.subr.bf16.mxu0 0
    %382 = vmatpush1.bf16.msra.mxu0 0
    %383 = vmatprep.subr.bf16.mxu0 0
    %384 = vmatpush1.bf16.msra.mxu0 0
    %385 = vmatprep.subr.bf16.mxu0 0
    %386 = vmatpush1.bf16.msra.mxu0 0
    %387 = vmatprep.mubr.bf16.mxu0 0
    %388 = vmatmul.mubr.bf16.gmra.mrb[0].mxu0 %v353
    %v389 = vpop.f32.mrb[0].mxu0
    %v390 = vadd.f32 %v104, %v389
    %v391 = vpop.f32.mrb[0].mxu0
    %v392 = vpop.f32.mrb[0].mxu0
    %v393 = vpop.f32.mrb[0].mxu0
    %394 = vdwg.mxu0
    %v395 = vsel %vm176, %v390, 0.0
    %396 = vadd.xlane.f32.xlu0 %v395
    %v397 = vpop.xlane.xlu0 %396
    %v398 = vmul.f32 %v397, %v180
    %v399 = vsub.f32 %v390, %v398
    %v400 = vmul.f32 %v399, %v399
    %v401 = vsel %vm176, %v400, 0.0
    %402 = vadd.xlane.f32.xlu0 %v401
    %v403 = vpop.xlane.xlu0 %402
    %v404 = vmul.f32 %v403, %v180
    %v405 = vadd.f32 %v404, 1e-05
    %v406 = vrsqrt.pop %v405
    %v407 = vmul.f32 %v399, %v406
    %v408 = vmul.f32 %v407, %v195
    %v409 = vadd.f32 %v408, %v202
    %v410 = vsel %vm176, %v409, 0.0
    %411 = vadd.xlane.f32.xlu0 %v410
    %v412 = vpop.xlane.xlu0 %411
    %v413 = vmul.f32 %v409, %v409
    %v414 = vsel %vm176, %v413, 0.0
    %415 = vadd.xlane.f32.xlu0 %v414
    %v416 = vpop.xlane.xlu0 %415
    %v417 = vadd.f32 %v348, %v412
    %v418 = vadd.f32 %v349, %v416
    %v419 = vrcp.pop 384.0
    %v420 = vmul.f32 %v417, %v419
    %v421 = vmul.f32 %v418, %v419
    %v422 = vmul.f32 %v420, %v420
    %v423 = vsub.f32 %v421, %v422
    %v424 = vmax.f32 %v423, 0.0
    %v425 = vadd.f32 %v424, 1e-05
    %v426 = vrsqrt.pop %v425
    %v427 = vsub.f32 %v204, %v420
    %v428 = vmul.f32 %v427, %v426
    %v429 = vld [vmem:[%s5] sm:$0x1]
    %v431 = vlaneseq
    %v432 = vshrl.u32 %v431, 7
    %v433 = vsub.s32 0, %v432
    %v434 = vrot.slane %v429, %v433
    %v436 = vmul.f32 %v428, %v434
    %v437 = vld [vmem:[%s6] sm:$0x1]
    %v439 = vlaneseq
    %v440 = vshrl.u32 %v439, 7
    %v441 = vsub.s32 0, %v440
    %v442 = vrot.slane %v437, %v441
    %v444 = vadd.f32 %v436, %v442
    %v445 = vpack.c.bf16 %v444, %v444
    %v446 = vld [vmem:[#allocation8] sm:$0xff]
    %v447 = vld [vmem:[#allocation8 + $0x8] sm:$0xff]
    %v448 = vld [vmem:[#allocation8 + $0x10] sm:$0xff]
    %v449 = vld [vmem:[#allocation8 + $0x18] sm:$0xff]
    %v450 = vld [vmem:[#allocation8 + $0x20] sm:$0xff]
    %v451 = vld [vmem:[#allocation8 + $0x28] sm:$0xff]
    %v452 = vld [vmem:[#allocation8 + $0x30] sm:$0xff]
    %v453 = vld [vmem:[#allocation8 + $0x38] sm:$0xff]
    %v454 = vld [vmem:[#allocation8 + $0x40] sm:$0xff]
    %v455 = vld [vmem:[#allocation8 + $0x48] sm:$0xff]
    %v456 = vld [vmem:[#allocation8 + $0x50] sm:$0xff]
    %v457 = vld [vmem:[#allocation8 + $0x58] sm:$0xff]
    %v458 = vsub.f32 %v271, %v420
    %v459 = vmul.f32 %v458, %v426
    %s460 = scalar_lea.vmem %s5, 1
    %v461 = vld [vmem:[%s460] sm:$0x1]
    %v463 = vlaneseq
    %v464 = vshrl.u32 %v463, 7
    %v465 = vsub.s32 0, %v464
    %v466 = vrot.slane %v461, %v465
    %v468 = vmul.f32 %v459, %v466
    %s469 = scalar_lea.vmem %s6, 1
    %v470 = vld [vmem:[%s469] sm:$0x1]
    %v472 = vlaneseq
    %v473 = vshrl.u32 %v472, 7
    %v474 = vsub.s32 0, %v473
    %v475 = vrot.slane %v470, %v474
    %v477 = vadd.f32 %v468, %v475
    %v478 = vpack.c.bf16 %v477, %v477
    %s479 = scalar_lea.vmem [#allocation8], 96
    %v480 = vld [vmem:[%s479] sm:$0xff]
    %v481 = vld [vmem:[%s479 + $0x8] sm:$0xff]
    %v482 = vld [vmem:[%s479 + $0x10] sm:$0xff]
    %v483 = vld [vmem:[%s479 + $0x18] sm:$0xff]
    %v484 = vld [vmem:[%s479 + $0x20] sm:$0xff]
    %v485 = vld [vmem:[%s479 + $0x28] sm:$0xff]
    %v486 = vld [vmem:[%s479 + $0x30] sm:$0xff]
    %v487 = vld [vmem:[%s479 + $0x38] sm:$0xff]
    %v488 = vld [vmem:[%s479 + $0x40] sm:$0xff]
    %v489 = vld [vmem:[%s479 + $0x48] sm:$0xff]
    %v490 = vld [vmem:[%s479 + $0x50] sm:$0xff]
    %v491 = vld [vmem:[%s479 + $0x58] sm:$0xff]
    %v504 = vunpack.c.l.b16 %v480
    %v505 = vunpack.c.h.b16 %v480
    %v506 = vunpack.c.l.b16 %v481
    %v507 = vunpack.c.h.b16 %v481
    %v508 = vunpack.c.l.b16 %v482
    %v509 = vunpack.c.h.b16 %v482
    %v510 = vunpack.c.l.b16 %v483
    %v511 = vunpack.c.h.b16 %v483
    %v512 = vunpack.c.l.b16 %v484
    %v513 = vunpack.c.h.b16 %v484
    %v514 = vunpack.c.l.b16 %v485
    %v515 = vunpack.c.h.b16 %v485
    %v516 = vunpack.c.l.b16 %v486
    %v517 = vunpack.c.h.b16 %v486
    %v518 = vunpack.c.l.b16 %v487
    %v519 = vunpack.c.h.b16 %v487
    %v520 = vunpack.c.l.b16 %v488
    %v521 = vunpack.c.h.b16 %v488
    %v522 = vunpack.c.l.b16 %v489
    %v523 = vunpack.c.h.b16 %v489
    %v524 = vunpack.c.l.b16 %v490
    %v525 = vunpack.c.h.b16 %v490
    %v526 = vunpack.c.l.b16 %v491
    %v527 = vunpack.c.h.b16 %v491
    %v528 = vpack.c.b16 %v506, %v504
    %v529 = vpack.c.b16 %v507, %v505
    %v530 = vpack.c.b16 %v510, %v508
    %v531 = vpack.c.b16 %v511, %v509
    %v532 = vpack.c.b16 %v514, %v512
    %v533 = vpack.c.b16 %v515, %v513
    %v534 = vpack.c.b16 %v518, %v516
    %v535 = vpack.c.b16 %v519, %v517
    %v536 = vpack.c.b16 %v522, %v520
    %v537 = vpack.c.b16 %v523, %v521
    %v538 = vpack.c.b16 %v526, %v524
    %v539 = vpack.c.b16 %v527, %v525
    %v553 = vsel %vm176, %v478, 0
    %555 = vmatprep.subr.bf16.mxu0 %v529
    %556 = vmatpush1.bf16.msra.mxu0 %v528
    %557 = vmatprep.subr.bf16.mxu0 %v531
    %558 = vmatpush1.bf16.msra.mxu0 %v530
    %559 = vmatprep.subr.bf16.mxu0 %v533
    %560 = vmatpush1.bf16.msra.mxu0 %v532
    %561 = vmatprep.subr.bf16.mxu0 %v535
    %562 = vmatpush1.bf16.msra.mxu0 %v534
    %563 = vmatprep.subr.bf16.mxu0 %v537
    %564 = vmatpush1.bf16.msra.mxu0 %v536
    %565 = vmatprep.subr.bf16.mxu0 %v539
    %566 = vmatpush1.bf16.msra.mxu0 %v538
    %567 = vmatprep.subr.bf16.mxu0 0
    %568 = vmatpush1.bf16.msra.mxu0 0
    %569 = vmatprep.subr.bf16.mxu0 0
    %570 = vmatpush1.bf16.msra.mxu0 0
    %571 = vmatprep.subr.bf16.mxu0 0
    %572 = vmatpush1.bf16.msra.mxu0 0
    %573 = vmatprep.subr.bf16.mxu0 0
    %574 = vmatpush1.bf16.msra.mxu0 0
    %575 = vmatprep.subr.bf16.mxu0 0
    %576 = vmatpush1.bf16.msra.mxu0 0
    %577 = vmatprep.subr.bf16.mxu0 0
    %578 = vmatpush1.bf16.msra.mxu0 0
    %579 = vmatprep.subr.bf16.mxu0 0
    %580 = vmatpush1.bf16.msra.mxu0 0
    %581 = vmatprep.subr.bf16.mxu0 0
    %582 = vmatpush1.bf16.msra.mxu0 0
    %583 = vmatprep.subr.bf16.mxu0 0
    %584 = vmatpush1.bf16.msra.mxu0 0
    %585 = vmatprep.subr.bf16.mxu0 0
    %586 = vmatpush1.bf16.msra.mxu0 0
    %587 = vmatprep.mubr.bf16.mxu0 0
    %588 = vmatmul.mubr.bf16.gmra.mrb[0].mxu0 %v553
    %v589 = vpop.f32.mrb[0].mxu0
    %v590 = vadd.f32 0.0, %v589
    %v591 = vpop.f32.mrb[0].mxu0
    %v592 = vadd.f32 0.0, %v591
    %v593 = vpop.f32.mrb[0].mxu0
    %v594 = vpop.f32.mrb[0].mxu0
    %595 = vdwg.mxu0
    %v608 = vunpack.c.l.b16 %v446
    %v609 = vunpack.c.h.b16 %v446
    %v610 = vunpack.c.l.b16 %v447
    %v611 = vunpack.c.h.b16 %v447
    %v612 = vunpack.c.l.b16 %v448
    %v613 = vunpack.c.h.b16 %v448
    %v614 = vunpack.c.l.b16 %v449
    %v615 = vunpack.c.h.b16 %v449
    %v616 = vunpack.c.l.b16 %v450
    %v617 = vunpack.c.h.b16 %v450
    %v618 = vunpack.c.l.b16 %v451
    %v619 = vunpack.c.h.b16 %v451
    %v620 = vunpack.c.l.b16 %v452
    %v621 = vunpack.c.h.b16 %v452
    %v622 = vunpack.c.l.b16 %v453
    %v623 = vunpack.c.h.b16 %v453
    %v624 = vunpack.c.l.b16 %v454
    %v625 = vunpack.c.h.b16 %v454
    %v626 = vunpack.c.l.b16 %v455
    %v627 = vunpack.c.h.b16 %v455
    %v628 = vunpack.c.l.b16 %v456
    %v629 = vunpack.c.h.b16 %v456
    %v630 = vunpack.c.l.b16 %v457
    %v631 = vunpack.c.h.b16 %v457
    %v632 = vpack.c.b16 %v610, %v608
    %v633 = vpack.c.b16 %v611, %v609
    %v634 = vpack.c.b16 %v614, %v612
    %v635 = vpack.c.b16 %v615, %v613
    %v636 = vpack.c.b16 %v618, %v616
    %v637 = vpack.c.b16 %v619, %v617
    %v638 = vpack.c.b16 %v622, %v620
    %v639 = vpack.c.b16 %v623, %v621
    %v640 = vpack.c.b16 %v626, %v624
    %v641 = vpack.c.b16 %v627, %v625
    %v642 = vpack.c.b16 %v630, %v628
    %v643 = vpack.c.b16 %v631, %v629
    %v657 = vsel %vm176, %v445, 0
    %659 = vmatprep.subr.bf16.mxu0 %v633
    %660 = vmatpush1.bf16.msra.mxu0 %v632
    %661 = vmatprep.subr.bf16.mxu0 %v635
    %662 = vmatpush1.bf16.msra.mxu0 %v634
    %663 = vmatprep.subr.bf16.mxu0 %v637
    %664 = vmatpush1.bf16.msra.mxu0 %v636
    %665 = vmatprep.subr.bf16.mxu0 %v639
    %666 = vmatpush1.bf16.msra.mxu0 %v638
    %667 = vmatprep.subr.bf16.mxu0 %v641
    %668 = vmatpush1.bf16.msra.mxu0 %v640
    %669 = vmatprep.subr.bf16.mxu0 %v643
    %670 = vmatpush1.bf16.msra.mxu0 %v642
    %671 = vmatprep.subr.bf16.mxu0 0
    %672 = vmatpush1.bf16.msra.mxu0 0
    %673 = vmatprep.subr.bf16.mxu0 0
    %674 = vmatpush1.bf16.msra.mxu0 0
    %675 = vmatprep.subr.bf16.mxu0 0
    %676 = vmatpush1.bf16.msra.mxu0 0
    %677 = vmatprep.subr.bf16.mxu0 0
    %678 = vmatpush1.bf16.msra.mxu0 0
    %679 = vmatprep.subr.bf16.mxu0 0
    %680 = vmatpush1.bf16.msra.mxu0 0
    %681 = vmatprep.subr.bf16.mxu0 0
    %682 = vmatpush1.bf16.msra.mxu0 0
    %683 = vmatprep.subr.bf16.mxu0 0
    %684 = vmatpush1.bf16.msra.mxu0 0
    %685 = vmatprep.subr.bf16.mxu0 0
    %686 = vmatpush1.bf16.msra.mxu0 0
    %687 = vmatprep.subr.bf16.mxu0 0
    %688 = vmatpush1.bf16.msra.mxu0 0
    %689 = vmatprep.subr.bf16.mxu0 0
    %690 = vmatpush1.bf16.msra.mxu0 0
    %691 = vmatprep.mubr.bf16.mxu0 0
    %692 = vmatmul.mubr.bf16.gmra.mrb[0].mxu0 %v657
    %v693 = vpop.f32.mrb[0].mxu0
    %v694 = vadd.f32 %v590, %v693
    %v695 = vpop.f32.mrb[0].mxu0
    %v696 = vadd.f32 %v592, %v695
    %v697 = vpop.f32.mrb[0].mxu0
    %v698 = vpop.f32.mrb[0].mxu0
    %699 = vdwg.mxu0
    %v700 = vsub.f32 %v340, %v420
    %v701 = vmul.f32 %v700, %v426
    %s702 = scalar_lea.vmem %s5, 2
    %v703 = vld [vmem:[%s702] sm:$0x1]
    %v705 = vlaneseq
    %v706 = vshrl.u32 %v705, 7
    %v707 = vsub.s32 0, %v706
    %v708 = vrot.slane %v703, %v707
    %v710 = vmul.f32 %v701, %v708
    %s711 = scalar_lea.vmem %s6, 2
    %v712 = vld [vmem:[%s711] sm:$0x1]
    %v714 = vlaneseq
    %v715 = vshrl.u32 %v714, 7
    %v716 = vsub.s32 0, %v715
    %v717 = vrot.slane %v712, %v716
    %v719 = vadd.f32 %v710, %v717
    %v720 = vpack.c.bf16 %v719, %v719
    %s721 = scalar_lea.vmem [#allocation8], 192
    %v722 = vld [vmem:[%s721] sm:$0xff]
    %v723 = vld [vmem:[%s721 + $0x8] sm:$0xff]
    %v724 = vld [vmem:[%s721 + $0x10] sm:$0xff]
    %v725 = vld [vmem:[%s721 + $0x18] sm:$0xff]
    %v726 = vld [vmem:[%s721 + $0x20] sm:$0xff]
    %v727 = vld [vmem:[%s721 + $0x28] sm:$0xff]
    %v728 = vld [vmem:[%s721 + $0x30] sm:$0xff]
    %v729 = vld [vmem:[%s721 + $0x38] sm:$0xff]
    %v730 = vld [vmem:[%s721 + $0x40] sm:$0xff]
    %v731 = vld [vmem:[%s721 + $0x48] sm:$0xff]
    %v732 = vld [vmem:[%s721 + $0x50] sm:$0xff]
    %v733 = vld [vmem:[%s721 + $0x58] sm:$0xff]
    %v746 = vunpack.c.l.b16 %v722
    %v747 = vunpack.c.h.b16 %v722
    %v748 = vunpack.c.l.b16 %v723
    %v749 = vunpack.c.h.b16 %v723
    %v750 = vunpack.c.l.b16 %v724
    %v751 = vunpack.c.h.b16 %v724
    %v752 = vunpack.c.l.b16 %v725
    %v753 = vunpack.c.h.b16 %v725
    %v754 = vunpack.c.l.b16 %v726
    %v755 = vunpack.c.h.b16 %v726
    %v756 = vunpack.c.l.b16 %v727
    %v757 = vunpack.c.h.b16 %v727
    %v758 = vunpack.c.l.b16 %v728
    %v759 = vunpack.c.h.b16 %v728
    %v760 = vunpack.c.l.b16 %v729
    %v761 = vunpack.c.h.b16 %v729
    %v762 = vunpack.c.l.b16 %v730
    %v763 = vunpack.c.h.b16 %v730
    %v764 = vunpack.c.l.b16 %v731
    %v765 = vunpack.c.h.b16 %v731
    %v766 = vunpack.c.l.b16 %v732
    %v767 = vunpack.c.h.b16 %v732
    %v768 = vunpack.c.l.b16 %v733
    %v769 = vunpack.c.h.b16 %v733
    %v770 = vpack.c.b16 %v748, %v746
    %v771 = vpack.c.b16 %v749, %v747
    %v772 = vpack.c.b16 %v752, %v750
    %v773 = vpack.c.b16 %v753, %v751
    %v774 = vpack.c.b16 %v756, %v754
    %v775 = vpack.c.b16 %v757, %v755
    %v776 = vpack.c.b16 %v760, %v758
    %v777 = vpack.c.b16 %v761, %v759
    %v778 = vpack.c.b16 %v764, %v762
    %v779 = vpack.c.b16 %v765, %v763
    %v780 = vpack.c.b16 %v768, %v766
    %v781 = vpack.c.b16 %v769, %v767
    %v795 = vsel %vm176, %v720, 0
    %797 = vmatprep.subr.bf16.mxu0 %v771
    %798 = vmatpush1.bf16.msra.mxu0 %v770
    %799 = vmatprep.subr.bf16.mxu0 %v773
    %800 = vmatpush1.bf16.msra.mxu0 %v772
    %801 = vmatprep.subr.bf16.mxu0 %v775
    %802 = vmatpush1.bf16.msra.mxu0 %v774
    %803 = vmatprep.subr.bf16.mxu0 %v777
    %804 = vmatpush1.bf16.msra.mxu0 %v776
    %805 = vmatprep.subr.bf16.mxu0 %v779
    %806 = vmatpush1.bf16.msra.mxu0 %v778
    %807 = vmatprep.subr.bf16.mxu0 %v781
    %808 = vmatpush1.bf16.msra.mxu0 %v780
    %809 = vmatprep.subr.bf16.mxu0 0
    %810 = vmatpush1.bf16.msra.mxu0 0
    %811 = vmatprep.subr.bf16.mxu0 0
    %812 = vmatpush1.bf16.msra.mxu0 0
    %813 = vmatprep.subr.bf16.mxu0 0
    %814 = vmatpush1.bf16.msra.mxu0 0
    %815 = vmatprep.subr.bf16.mxu0 0
    %816 = vmatpush1.bf16.msra.mxu0 0
    %817 = vmatprep.subr.bf16.mxu0 0
    %818 = vmatpush1.bf16.msra.mxu0 0
    %819 = vmatprep.subr.bf16.mxu0 0
    %820 = vmatpush1.bf16.msra.mxu0 0
    %821 = vmatprep.subr.bf16.mxu0 0
    %822 = vmatpush1.bf16.msra.mxu0 0
    %823 = vmatprep.subr.bf16.mxu0 0
    %824 = vmatpush1.bf16.msra.mxu0 0
    %825 = vmatprep.subr.bf16.mxu0 0
    %826 = vmatpush1.bf16.msra.mxu0 0
    %827 = vmatprep.subr.bf16.mxu0 0
    %828 = vmatpush1.bf16.msra.mxu0 0
    %829 = vmatprep.mubr.bf16.mxu0 0
    %830 = vmatmul.mubr.bf16.gmra.mrb[0].mxu0 %v795
    %v831 = vpop.f32.mrb[0].mxu0
    %v832 = vadd.f32 0.0, %v831
    %v833 = vpop.f32.mrb[0].mxu0
    %v834 = vadd.f32 0.0, %v833
    %v835 = vpop.f32.mrb[0].mxu0
    %v836 = vpop.f32.mrb[0].mxu0
    %837 = vdwg.mxu0
    %v838 = vadd.f32 %v694, %v832
    %v839 = vadd.f32 %v696, %v834
    %v840 = vsub.f32 %v409, %v420
    %v841 = vmul.f32 %v840, %v426
    %s842 = scalar_lea.vmem %s5, 3
    %v843 = vld [vmem:[%s842] sm:$0x1]
    %v845 = vlaneseq
    %v846 = vshrl.u32 %v845, 7
    %v847 = vsub.s32 0, %v846
    %v848 = vrot.slane %v843, %v847
    %v850 = vmul.f32 %v841, %v848
    %s851 = scalar_lea.vmem %s6, 3
    %v852 = vld [vmem:[%s851] sm:$0x1]
    %v854 = vlaneseq
    %v855 = vshrl.u32 %v854, 7
    %v856 = vsub.s32 0, %v855
    %v857 = vrot.slane %v852, %v856
    %v859 = vadd.f32 %v850, %v857
    %v860 = vpack.c.bf16 %v859, %v859
    %s861 = scalar_lea.vmem [#allocation8], 288
    %v862 = vld [vmem:[%s861] sm:$0xff]
    %v863 = vld [vmem:[%s861 + $0x8] sm:$0xff]
    %v864 = vld [vmem:[%s861 + $0x10] sm:$0xff]
    %v865 = vld [vmem:[%s861 + $0x18] sm:$0xff]
    %v866 = vld [vmem:[%s861 + $0x20] sm:$0xff]
    %v867 = vld [vmem:[%s861 + $0x28] sm:$0xff]
    %v868 = vld [vmem:[%s861 + $0x30] sm:$0xff]
    %v869 = vld [vmem:[%s861 + $0x38] sm:$0xff]
    %v870 = vld [vmem:[%s861 + $0x40] sm:$0xff]
    %v871 = vld [vmem:[%s861 + $0x48] sm:$0xff]
    %v872 = vld [vmem:[%s861 + $0x50] sm:$0xff]
    %v873 = vld [vmem:[%s861 + $0x58] sm:$0xff]
    %v886 = vunpack.c.l.b16 %v862
    %v887 = vunpack.c.h.b16 %v862
    %v888 = vunpack.c.l.b16 %v863
    %v889 = vunpack.c.h.b16 %v863
    %v890 = vunpack.c.l.b16 %v864
    %v891 = vunpack.c.h.b16 %v864
    %v892 = vunpack.c.l.b16 %v865
    %v893 = vunpack.c.h.b16 %v865
    %v894 = vunpack.c.l.b16 %v866
    %v895 = vunpack.c.h.b16 %v866
    %v896 = vunpack.c.l.b16 %v867
    %v897 = vunpack.c.h.b16 %v867
    %v898 = vunpack.c.l.b16 %v868
    %v899 = vunpack.c.h.b16 %v868
    %v900 = vunpack.c.l.b16 %v869
    %v901 = vunpack.c.h.b16 %v869
    %v902 = vunpack.c.l.b16 %v870
    %v903 = vunpack.c.h.b16 %v870
    %v904 = vunpack.c.l.b16 %v871
    %v905 = vunpack.c.h.b16 %v871
    %v906 = vunpack.c.l.b16 %v872
    %v907 = vunpack.c.h.b16 %v872
    %v908 = vunpack.c.l.b16 %v873
    %v909 = vunpack.c.h.b16 %v873
    %v910 = vpack.c.b16 %v888, %v886
    %v911 = vpack.c.b16 %v889, %v887
    %v912 = vpack.c.b16 %v892, %v890
    %v913 = vpack.c.b16 %v893, %v891
    %v914 = vpack.c.b16 %v896, %v894
    %v915 = vpack.c.b16 %v897, %v895
    %v916 = vpack.c.b16 %v900, %v898
    %v917 = vpack.c.b16 %v901, %v899
    %v918 = vpack.c.b16 %v904, %v902
    %v919 = vpack.c.b16 %v905, %v903
    %v920 = vpack.c.b16 %v908, %v906
    %v921 = vpack.c.b16 %v909, %v907
    %v935 = vsel %vm176, %v860, 0
    %937 = vmatprep.subr.bf16.mxu0 %v911
    %938 = vmatpush1.bf16.msra.mxu0 %v910
    %939 = vmatprep.subr.bf16.mxu0 %v913
    %940 = vmatpush1.bf16.msra.mxu0 %v912
    %941 = vmatprep.subr.bf16.mxu0 %v915
    %942 = vmatpush1.bf16.msra.mxu0 %v914
    %943 = vmatprep.subr.bf16.mxu0 %v917
    %944 = vmatpush1.bf16.msra.mxu0 %v916
    %945 = vmatprep.subr.bf16.mxu0 %v919
    %946 = vmatpush1.bf16.msra.mxu0 %v918
    %947 = vmatprep.subr.bf16.mxu0 %v921
    %948 = vmatpush1.bf16.msra.mxu0 %v920
    %949 = vmatprep.subr.bf16.mxu0 0
    %950 = vmatpush1.bf16.msra.mxu0 0
    %951 = vmatprep.subr.bf16.mxu0 0
    %952 = vmatpush1.bf16.msra.mxu0 0
    %953 = vmatprep.subr.bf16.mxu0 0
    %954 = vmatpush1.bf16.msra.mxu0 0
    %955 = vmatprep.subr.bf16.mxu0 0
    %956 = vmatpush1.bf16.msra.mxu0 0
    %957 = vmatprep.subr.bf16.mxu0 0
    %958 = vmatpush1.bf16.msra.mxu0 0
    %959 = vmatprep.subr.bf16.mxu0 0
    %960 = vmatpush1.bf16.msra.mxu0 0
    %961 = vmatprep.subr.bf16.mxu0 0
    %962 = vmatpush1.bf16.msra.mxu0 0
    %963 = vmatprep.subr.bf16.mxu0 0
    %964 = vmatpush1.bf16.msra.mxu0 0
    %965 = vmatprep.subr.bf16.mxu0 0
    %966 = vmatpush1.bf16.msra.mxu0 0
    %967 = vmatprep.subr.bf16.mxu0 0
    %968 = vmatpush1.bf16.msra.mxu0 0
    %969 = vmatprep.mubr.bf16.mxu0 0
    %970 = vmatmul.mubr.bf16.gmra.mrb[0].mxu0 %v935
    %v971 = vpop.f32.mrb[0].mxu0
    %v972 = vadd.f32 0.0, %v971
    %v973 = vpop.f32.mrb[0].mxu0
    %v974 = vadd.f32 0.0, %v973
    %v975 = vpop.f32.mrb[0].mxu0
    %v976 = vpop.f32.mrb[0].mxu0
    %977 = vdwg.mxu0
    %v978 = vadd.f32 %v838, %v972
    %v979 = vadd.f32 %v839, %v974
    %v980 = vld [vmem:[%s8] sm:$0x3]
    %v981 = vld [vmem:[%s9] sm:$0x3]
    %v982 = vsel %vm130, %v979, 0.0
    %v983 = vadd.f32 %v978, %v982
    %984 = vadd.xlane.f32.xlu0 %v983
    %v985 = vpop.xlane.xlu0 %984
    %v986 = vrcp.pop 192.0
    %v987 = vmul.f32 %v985, %v986
    %v988 = vsub.f32 %v978, %v987
    %v989 = vsub.f32 %v979, %v987
    %v990 = vmul.f32 %v988, %v988
    %v991 = vmul.f32 %v989, %v989
    %v992 = vsel %vm130, %v991, 0.0
    %v993 = vadd.f32 %v990, %v992
    %994 = vadd.xlane.f32.xlu0 %v993
    %v995 = vpop.xlane.xlu0 %994
    %v996 = vmul.f32 %v995, %v986
    %v997 = vadd.f32 %v996, 1e-05
    %v998 = vrsqrt.pop %v997
    %v999 = vmul.f32 %v988, %v998
    %v1000 = vmul.f32 %v989, %v998
    %v1002 = vlaneseq
    %v1003 = vshrl.u32 %v1002, 7
    %v1004 = vsub.s32 0, %v1003
    %v1005 = vrot.slane %v980, %v1004
    %v1006 = vlaneseq
    %v1007 = vshrl.u32 %v1006, 7
    %v1008 = vsub.s32 1, %v1007
    %v1009 = vrot.slane %v980, %v1008
    %v1012 = vmul.f32 %v999, %v1005
    %v1013 = vmul.f32 %v1000, %v1009
    %v1015 = vlaneseq
    %v1016 = vshrl.u32 %v1015, 7
    %v1017 = vsub.s32 0, %v1016
    %v1018 = vrot.slane %v981, %v1017
    %v1019 = vlaneseq
    %v1020 = vshrl.u32 %v1019, 7
    %v1021 = vsub.s32 1, %v1020
    %v1022 = vrot.slane %v981, %v1021
    %v1025 = vadd.f32 %v1012, %v1018
    %v1026 = vadd.f32 %v1013, %v1022
    %v1027 = vpack.c.bf16 %v1025, %v1025
    %v1028 = vpack.c.bf16 %v1026, %v1026
    %v1031 = vunpack.c.l.b16 %v1027
    %v1032 = vunpack.c.l.b16 %v1028
    %v1033 = vpack.c.b16 %v1032, %v1031
    %vm1035 = vcmask 1043456
    %vm1036 = vcmask 523268
    %vm1037 = vmor %vm1036, %vm1035
    %1038 = vst.msk [vmem:[#allocation10] sm:$0xff] %vm1037, %v1033
    // Predicated region
    $region58: #{tpu_custom_call.1} parent=1 // pred_check
      _
    $region59: #{tpu_custom_call.1} parent=1 // pred_check_branch
      %1040 = sbr.rel (0) target = $region61
    $region60: #{tpu_custom_call.1} parent=1 // pred_region
      %s1042 = ssub.s32 128, 128
      %1043 = vsyncadd [#allocation4], %s1042
      %s1045 = sshll.u32 [#allocation10], 4
      %s1046 = int_to_ptr.vmem [resolvable:$true] %s1045
      %1048 = dma.vmem_to_hbm [thread:$0]  %s1046, 128, %s10, [#allocation4]
    $region61: #{tpu_custom_call.1} parent=1 // pred_fallthru
      _
    // Predicated region
    $region62: #{tpu_custom_call.1} parent=1 // pred_check
      _
    $region63: #{tpu_custom_call.1} parent=1 // pred_check_branch
      %1050 = sbr.rel (0) target = $region65
    $region64: #{tpu_custom_call.1} parent=1 // pred_region
      %1051 = dma.done [#allocation4], 128
    $region65: #{tpu_custom_call.1} parent=1 // pred_fallthru
      _
    %1052 = vsyncpa [#allocation3], 1
    %1053 = vsyncpa [#allocation6], 1
    %1054 = vsyncpa [#allocation9], 1
    %1055 = vsyncpa [#allocation4], 1

</llo_original>
